<compile_context>
chip_gen: v6e
topology: v6e:2x2x1
jax: 0.10.0
libtpu: 0.0.40
codegen_flags: <defaults>
</compile_context>

<pallas_src>
import functools

import jax
import jax.numpy as jnp
from jax.experimental import pallas as pl
from jax.experimental.pallas import tpu as pltpu

MODALITIES = ("vggish", "speech")
AUDIO_DIMS = {"vggish": (32, 64), "speech": (48, 64)}
TEXT_DIM = 32
HIDDEN_SIZE = {"vggish": 32, "speech": 48}
FEAT_AGGREGATION = {m: {"temporal": "meanP"} for m in MODALITIES}
BN_EPS = 1e-5

NUM_MODS = len(MODALITIES)
OUT_DIMS = tuple(AUDIO_DIMS[m][1] for m in MODALITIES)                  # (64, 64)
OUT_OFFS = tuple(int(sum(OUT_DIMS[:i])) for i in range(NUM_MODS))        # (0, 64)
TOTAL_OUT = int(sum(OUT_DIMS))                                           # 128 -> lane dense
IN_DIMS_AUDIO = tuple(HIDDEN_SIZE[m] for m in MODALITIES)                # (32, 48)
TOTAL_IN_AUDIO = int(sum(IN_DIMS_AUDIO))                                 # 80

# Row layout of the packed (R_TOTAL, 128) parameter slab ("vecs"): one DMA instead
# of nine separate (1,128) inputs that each pad to a full (8,128) tile anyway.
R_BT1, R_BT2, R_GT, R_BQT = 0, 1, 2, 3       # text GEU: fc bias, cg bias, BN gamma/beta
R_BA1, R_BA2, R_GA, R_BQA = 4, 5, 6, 7       # audio GEU: fc bias, cg bias, BN gamma/beta
R_BM = 8                                     # moe_fc bias, lane-replicated per modality
R_INVW = 9                                   # 1 / out_dim of each lane's modality
R_BLK = 10                                   # NUM_MODS modality-membership indicator rows
R_TOTAL = R_BLK + NUM_MODS                   # 12


# ------------------------------ fused kernel -------------------------------

def _geu_block(x, w1, b1, w2, b2, gamma, beta, blk):
    """GatedEmbeddingUnit on a lane-stacked (both-modalities, 128-lane) slab.

    h  = x @ W1 + b1                      (nn.Linear; per-modality columns)
    z  = h @ W2 + b2                      (ContextGating.fc; W2 block-diagonal)
    zn = BatchNorm1d(z)                   (training: batch mean / biased variance)
    g  = h * sigmoid(zn)
    out = per-modality L2-normalised g    (kept 128-lane dense via indicator matmuls)
    """
    h = jnp.dot(x, w1, preferred_element_type=jnp.float32) + b1
    z = jnp.dot(h, w2, preferred_element_type=jnp.float32) + b2
    mu = jnp.mean(z, axis=0, keepdims=True)
    var = jnp.mean(jnp.square(z - mu), axis=0, keepdims=True)
    zn = (z - mu) * jax.lax.rsqrt(var + BN_EPS) * gamma + beta
    g = h * jax.nn.sigmoid(zn)
    # per-modality ||.||^2, broadcast back across that modality's lanes — factored
    # "block-ones" done as two MXU matmuls against the (M,128) indicator rows.
    gg = g * g
    ssm = jax.lax.dot_general(gg, blk, dimension_numbers=(((1,), (1,)), ((), ())),
                              preferred_element_type=jnp.float32)        # (N, M)
    ss = jnp.dot(ssm, blk, preferred_element_type=jnp.float32)           # (N, 128)
    # x / max(||x||, 1e-12) == x * rsqrt(max(||x||^2, 1e-24))
    return g * jax.lax.rsqrt(jnp.maximum(ss, 1e-24))


def _fused_pooling_kernel(text_ref, audio_ref, avail_ref,
                          wt1_ref, wt2_ref, wa1_ref, wa2_ref, wm_ref, vecs_ref,
                          sims_ref, tslab_ref, aslab_ref, stk_ref, *, ncaps):
    """Whole PoolingModule forward (training mode) in one VMEM-resident kernel.

    Text rows arrive caption-major: row index = k * B + b.
    """
    vecs = vecs_ref[...]
    row = lambda r: vecs[r:r + 1, :]
    blk = vecs[R_BLK:R_BLK + NUM_MODS, :]                                # (M, 128)

    # text / audio GatedEmbeddingUnits, both modalities stacked to 128 lanes
    text = text_ref[...]
    t_slab = _geu_block(text, wt1_ref[...], row(R_BT1), wt2_ref[...], row(R_BT2),
                        row(R_GT), row(R_BQT), blk)
    a_slab = _geu_block(audio_ref[...], wa1_ref[...], row(R_BA1), wa2_ref[...], row(R_BA2),
                        row(R_GA), row(R_BQA), blk)
    tslab_ref[...] = t_slab
    aslab_ref[...] = a_slab

    # compute_moe_weights (freeze_weights=False): softmax(Linear(text), dim=1).
    # The softmax denominator cancels against the availability re-normalisation
    # below, so only the max-shifted exponentials are needed.  Wm / bm were
    # lane-replicated per modality at pack time, so `exps` is already the
    # (TK, 128) per-lane weight slab.
    logits = jnp.dot(text, wm_ref[...], preferred_element_type=jnp.float32) + row(R_BM)
    exps = jnp.exp(logits - jnp.max(logits, axis=1, keepdims=True))      # (TK, 128)

    # sharded_cross_view_inner_product (l2renorm == False) as one lane-dense matmul:
    #   sims_tk[t,b] = sum_i w_i(t) a_i(b) (t_i . v_i)  /  sum_i w_i(t) a_i(b)
    avail = avail_ref[...]                                               # (B, 128)
    dots = jax.lax.dot_general(t_slab * exps, a_slab * avail,
                               dimension_numbers=(((1,), (1,)), ((), ())),
                               preferred_element_type=jnp.float32)       # (TK, B)
    denom = jax.lax.dot_general(exps, avail * row(R_INVW),
                                dimension_numbers=(((1,), (1,)), ((), ())),
                                preferred_element_type=jnp.float32)      # (TK, B)
    # NOTE: matches the PyTorch reference exactly — no epsilon; a video with every
    # modality unavailable yields denom == 0 -> NaN there too.
    stk_ref[...] = dots * pl.reciprocal(denom, approx=False)

    # caption merge 'avg' (training): mean over the K captions of each batch row.
    # Caption-major row ordering makes each caption a contiguous (B, B) block, so
    # the old dense (B, B*K) averaging matmul becomes K contiguous-block adds.
    nb = sims_ref.shape[0]
    acc = stk_ref[pl.ds(0, nb), :]
    for k in range(1, ncaps):
        acc = acc + stk_ref[pl.ds(k * nb, nb), :]
    sims_ref[...] = acc * (1.0 / ncaps)


# ------------------------- parameter initialisation ------------------------

def _init_linear(key, din, dout):
    kw, kb = jax.random.split(key)
    bound = 1.0 / (din ** 0.5)
    W = jax.random.uniform(kw, (din, dout), jnp.float32, -bound, bound)
    b = jax.random.uniform(kb, (1, dout), jnp.float32, -bound, bound)
    return W, b


def _init_geu(key, din, dout):
    k1, k2 = jax.random.split(key)
    W1, b1 = _init_linear(k1, din, dout)
    W2, b2 = _init_linear(k2, dout, dout)
    return {"W1": W1, "b1": b1, "W2": W2, "b2": b2,
            "gamma": jnp.ones((1, dout), jnp.float32),
            "beta": jnp.zeros((1, dout), jnp.float32)}


def init_params(key):
    in_dims, agg_dims = [], []
    for m in MODALITIES:
        assert FEAT_AGGREGATION[m]["temporal"] == "meanP"
        in_dims.append(HIDDEN_SIZE[m])          # meanP branch
        agg_dims.append(AUDIO_DIMS[m][1])
    keys = jax.random.split(key, 2 * NUM_MODS + 1)
    params = {"audio_GU": {}, "text_GU": {}}
    for i, m in enumerate(MODALITIES):
        params["audio_GU"][m] = _init_geu(keys[2 * i], in_dims[i], agg_dims[i])
        params["text_GU"][m] = _init_geu(keys[2 * i + 1], TEXT_DIM, agg_dims[i])
    Wm, bm = _init_linear(keys[-1], TEXT_DIM, NUM_MODS)
    params["moe_fc"] = {"W": Wm, "b": bm}
    return params


def _block_diag(mats):
    rows = sum(m.shape[0] for m in mats)
    cols = sum(m.shape[1] for m in mats)
    out = jnp.zeros((rows, cols), mats[0].dtype)
    r = c = 0
    for m in mats:
        out = out.at[r:r + m.shape[0], c:c + m.shape[1]].set(m)
        r += m.shape[0]
        c += m.shape[1]
    return out


def pack_params(p):
    """Stack both modalities into lane-dense (…,128) slabs; one packed vector slab."""
    tg = [p["text_GU"][m] for m in MODALITIES]
    ag = [p["audio_GU"][m] for m in MODALITIES]
    cat = lambda xs: jnp.concatenate(xs, axis=1)
    Wm, bm = p["moe_fc"]["W"], p["moe_fc"]["b"]
    # moe_fc weight/bias lane-replicated across each modality's output lanes
    wm_slab = jnp.concatenate([jnp.broadcast_to(Wm[:, i:i + 1], (TEXT_DIM, d))
                               for i, d in enumerate(OUT_DIMS)], axis=1)       # (32, 128)
    bm_slab = jnp.concatenate([jnp.broadcast_to(bm[:, i:i + 1], (1, d))
                               for i, d in enumerate(OUT_DIMS)], axis=1)       # (1, 128)
    inv_w = jnp.concatenate([jnp.full((1, d), 1.0 / d, jnp.float32)
                             for d in OUT_DIMS], axis=1)                       # (1, 128)
    blk = jnp.concatenate(
        [jnp.concatenate([jnp.full((1, d), 1.0 if i == j else 0.0, jnp.float32)
                          for j, d in enumerate(OUT_DIMS)], axis=1)
         for i in range(NUM_MODS)], axis=0)                                    # (M, 128)
    vecs = jnp.concatenate(
        [cat([g["b1"] for g in tg]), cat([g["b2"] for g in tg]),
         cat([g["gamma"] for g in tg]), cat([g["beta"] for g in tg]),
         cat([g["b1"] for g in ag]), cat([g["b2"] for g in ag]),
         cat([g["gamma"] for g in ag]), cat([g["beta"] for g in ag]),
         bm_slab, inv_w, blk], axis=0)                                         # (12, 128)
    return {
        # text branch: shared 32-d input -> concat W1 along output lanes
        "Wt1": cat([g["W1"] for g in tg]),            # (32, 128)
        "Wt2": _block_diag([g["W2"] for g in tg]),    # (128, 128), block-diagonal
        # audio branch: different input dims -> block-diagonal W1 on concatenated input
        "Wa1": _block_diag([g["W1"] for g in ag]),    # (80, 128)
        "Wa2": _block_diag([g["W2"] for g in ag]),    # (128, 128)
        "Wm": wm_slab,                                # (32, 128) lane-replicated
        "vecs": vecs,                                 # (12, 128) packed row vectors
    }


# ------------------------------- forward pass ------------------------------

@jax.jit
def _pooling_forward_jit(packed, text, experts, ind):
    B, K, D = text.shape
    TK = B * K
    # caption-major row order (row = k*B + b) so the in-kernel caption merge is a
    # sum of K contiguous (B,B) blocks (order-invariant for BN / per-row ops).
    text_cm = jnp.transpose(text, (1, 0, 2)).reshape(TK, D)
    audio_cat = jnp.concatenate([experts[m] for m in MODALITIES], axis=1)       # (B, 80)
    avail_slab = jnp.concatenate(
        [jnp.broadcast_to(ind[m].reshape(B, 1).astype(jnp.float32), (B, d))
         for m, d in zip(MODALITIES, OUT_DIMS)], axis=1)                        # (B, 128)

    # TODO(synk): if B*K ever scales up, add a row-tiled grid axis ("parallel" for
    # v7x's 2 TCs) with a two-pass BatchNorm, pad B to a multiple of 128 for
    # lane-dense sims stores, and consider bf16 MXU operands on v6e/v7x.
    f32b = 4
    resident = f32b * (
        TK * TEXT_DIM + B * TOTAL_IN_AUDIO + B * TOTAL_OUT                      # activations in
        + 2 * TEXT_DIM * TOTAL_OUT + 2 * TOTAL_OUT * TOTAL_OUT
        + TOTAL_IN_AUDIO * TOTAL_OUT + R_TOTAL * TOTAL_OUT                      # params in
        + B * B + (TK + B) * TOTAL_OUT                                          # outputs
        + TK * B                                                                # scratch
        + 8 * TK * TOTAL_OUT)                                                   # live temps
    vmem_limit = int(min(max(4 * resident, 16 << 20), 64 << 20))

    vmem = pl.BlockSpec(memory_space=pltpu.MemorySpace.VMEM)
    args = (text_cm, audio_cat, avail_slab,
            packed["Wt1"], packed["Wt2"], packed["Wa1"], packed["Wa2"],
            packed["Wm"], packed["vecs"])
    sims, t_slab, a_slab = pl.pallas_call(
        functools.partial(_fused_pooling_kernel, ncaps=K),
        out_shape=(jax.ShapeDtypeStruct((B, B), jnp.float32),
                   jax.ShapeDtypeStruct((TK, TOTAL_OUT), jnp.float32),
                   jax.ShapeDtypeStruct((B, TOTAL_OUT), jnp.float32)),
        in_specs=[vmem] * len(args),
        out_specs=(vmem, vmem, vmem),
        scratch_shapes=[pltpu.VMEM((TK, B), jnp.float32)],
        compiler_params=pltpu.CompilerParams(vmem_limit_bytes=vmem_limit),
    )(*args)

    # un-pack caption-major text slab back to (B, K, d) per modality
    t_full = jnp.transpose(t_slab.reshape(K, B, TOTAL_OUT), (1, 0, 2))          # (B, K, 128)
    text_embd, audio_embd = {}, {}
    for i, m in enumerate(MODALITIES):
        off, d = OUT_OFFS[i], OUT_DIMS[i]
        text_embd[m] = t_full[:, :, off:off + d]
        audio_embd[m] = a_slab[:, off:off + d]
    return sims, text_embd, audio_embd


def pooling_forward(packed, text, experts, ind):
    # TODO(synk): l2renorm=True pre/post renorm, freeze_weights=True, eval-mode
    # BatchNorm running stats, MaxMarginRankingLoss2 (sims_audio/sims_text) and the
    # 'indep' caption merge are not exercised by this configuration; not implemented.
    sims, text_embd, audio_embd = _pooling_forward_jit(packed, text, experts, ind)
    return {"modalities": list(MODALITIES),
            "cross_view_conf_matrix": sims,
            "text_embds": text_embd,
            "audio_embds": audio_embd}


# ------------------------ pure-JAX reference (check) ------------------------

def _reference_forward(params, text, experts, ind):
    def geu(x, q):
        h = x @ q["W1"] + q["b1"]
        z = h @ q["W2"] + q["b2"]
        mu = z.mean(0, keepdims=True)
        var = ((z - mu) ** 2).mean(0, keepdims=True)
        zn = (z - mu) / jnp.sqrt(var + BN_EPS) * q["gamma"] + q["beta"]
        g = h * jax.nn.sigmoid(zn)
        n = jnp.sqrt((g * g).sum(1, keepdims=True))
        return g / jnp.maximum(n, 1e-12)

    B, K, D = text.shape
    tf = text.reshape(B * K, D)
    te = {m: geu(tf, params["text_GU"][m]) for m in MODALITIES}
    ae = {m: geu(experts[m], params["audio_GU"][m]) for m in MODALITIES}
    moe = jax.nn.softmax(tf @ params["moe_fc"]["W"] + params["moe_fc"]["b"], axis=1)
    avail = jnp.stack([ind[m].reshape(-1) for m in MODALITIES], axis=-1)[None]   # (1,B,M)
    twt = moe.reshape(B * K, 1, -1) * avail
    twt = twt / twt.sum(2, keepdims=True)
    sims = jnp.zeros((B * K, B), jnp.float32)
    for i, m in enumerate(MODALITIES):
        sims = sims + twt[:, :, i] * (te[m] @ ae[m].T)
    return sims.reshape(B, K, B).mean(1)


# ----------------------------------- main -----------------------------------

if __name__ == "__main__":
    key = jax.random.PRNGKey(0)
    kp, kt, ke1, ke2 = jax.random.split(key, 4)
    params = init_params(kp)
    packed = pack_params(params)

    B, K = 2, 3
    text = jax.random.normal(kt, (B, K, TEXT_DIM), jnp.float32)
    experts = {
        "vggish": jax.random.normal(ke1, (B, HIDDEN_SIZE["vggish"]), jnp.float32),
        "speech": jax.random.normal(ke2, (B, HIDDEN_SIZE["speech"]), jnp.float32),
    }
    ind = {m: jnp.ones((B,), jnp.float32) for m in MODALITIES}

    out = pooling_forward(packed, text, experts, ind)
    sims = jax.block_until_ready(out["cross_view_conf_matrix"])

    assert sims.shape == (B, B)
    assert out["text_embds"]["vggish"].shape == (B, K, AUDIO_DIMS["vggish"][1])
    assert out["audio_embds"]["speech"].shape == (B, AUDIO_DIMS["speech"][1])

    ref_sims = _reference_forward(params, text, experts, ind)
    assert jnp.allclose(sims, ref_sims, atol=1e-4, rtol=1e-4), (sims, ref_sims)

    ref_te = _reference_forward  # (sims already checked; embeddings sanity below)
    assert bool(jnp.all(jnp.isfinite(out["text_embds"]["speech"])))
    print("KERNEL_OK")
</pallas_src>

<mosaic_0001>
module attributes {stable_mosaic.version = 11 : i64} {
  func.func @_fused_pooling_kernel(%arg0: memref<6x32xf32, #tpu.memory_space<vmem>>, %arg1: memref<2x80xf32, #tpu.memory_space<vmem>>, %arg2: memref<2x128xf32, #tpu.memory_space<vmem>>, %arg3: memref<32x128xf32, #tpu.memory_space<vmem>>, %arg4: memref<128x128xf32, #tpu.memory_space<vmem>>, %arg5: memref<80x128xf32, #tpu.memory_space<vmem>>, %arg6: memref<128x128xf32, #tpu.memory_space<vmem>>, %arg7: memref<32x128xf32, #tpu.memory_space<vmem>>, %arg8: memref<12x128xf32, #tpu.memory_space<vmem>>, %arg9: memref<2x2xf32, #tpu.memory_space<vmem>>, %arg10: memref<6x128xf32, #tpu.memory_space<vmem>>, %arg11: memref<2x128xf32, #tpu.memory_space<vmem>>, %arg12: memref<6x2xf32, #tpu.memory_space<vmem>>) attributes {dimension_semantics = [], scalar_prefetch = 0 : i64, scratch_operands = 1 : i64, tpu.core_type = #tpu.core_type<tc>} {
    %c0 = arith.constant 0 : index
    %c0_0 = arith.constant 0 : index
    %0 = vector.load %arg8[%c0, %c0_0] : memref<12x128xf32, #tpu.memory_space<vmem>>, vector<12x128xf32>
    %1 = vector.extract_strided_slice %0 {offsets = [10, 0], sizes = [2, 128], strides = [1, 1]} : vector<12x128xf32> to vector<2x128xf32>
    %c0_1 = arith.constant 0 : index
    %c0_2 = arith.constant 0 : index
    %2 = vector.load %arg0[%c0_1, %c0_2] : memref<6x32xf32, #tpu.memory_space<vmem>>, vector<6x32xf32>
    %c0_3 = arith.constant 0 : index
    %c0_4 = arith.constant 0 : index
    %3 = vector.load %arg3[%c0_3, %c0_4] : memref<32x128xf32, #tpu.memory_space<vmem>>, vector<32x128xf32>
    %4 = vector.extract_strided_slice %0 {offsets = [0, 0], sizes = [1, 128], strides = [1, 1]} : vector<12x128xf32> to vector<1x128xf32>
    %c0_5 = arith.constant 0 : index
    %c0_6 = arith.constant 0 : index
    %5 = vector.load %arg4[%c0_5, %c0_6] : memref<128x128xf32, #tpu.memory_space<vmem>>, vector<128x128xf32>
    %6 = vector.extract_strided_slice %0 {offsets = [1, 0], sizes = [1, 128], strides = [1, 1]} : vector<12x128xf32> to vector<1x128xf32>
    %7 = vector.extract_strided_slice %0 {offsets = [2, 0], sizes = [1, 128], strides = [1, 1]} : vector<12x128xf32> to vector<1x128xf32>
    %8 = vector.extract_strided_slice %0 {offsets = [3, 0], sizes = [1, 128], strides = [1, 1]} : vector<12x128xf32> to vector<1x128xf32>
    %cst = arith.constant dense<0.000000e+00> : vector<6x128xf32>
    %9 = tpu.matmul %2, %3, %cst {dimension_numbers = #tpu.dot_dimension_numbers<[1], [0], [0], [1], [0, 0, 1, 1], [], []>} : vector<6x32xf32>, vector<32x128xf32>, vector<6x128xf32> -> vector<6x128xf32>
    %10 = vector.broadcast %4 : vector<1x128xf32> to vector<6x128xf32>
    %11 = arith.addf %9, %10 : vector<6x128xf32>
    %cst_7 = arith.constant dense<0.000000e+00> : vector<6x128xf32>
    %12 = tpu.matmul %11, %5, %cst_7 {dimension_numbers = #tpu.dot_dimension_numbers<[1], [0], [0], [1], [0, 0, 1, 1], [], []>} : vector<6x128xf32>, vector<128x128xf32>, vector<6x128xf32> -> vector<6x128xf32>
    %13 = vector.broadcast %6 : vector<1x128xf32> to vector<6x128xf32>
    %14 = arith.addf %12, %13 : vector<6x128xf32>
    %cst_8 = arith.constant dense<0.000000e+00> : vector<128xf32>
    %15 = vector.multi_reduction <add>, %14, %cst_8 [0] : vector<6x128xf32> to vector<128xf32>
    %16 = vector.shape_cast %15 : vector<128xf32> to vector<1x128xf32>
    %cst_9 = arith.constant 6.000000e+00 : f32
    %17 = vector.broadcast %cst_9 : f32 to vector<1x128xf32>
    %18 = arith.divf %16, %17 : vector<1x128xf32>
    %19 = vector.broadcast %18 : vector<1x128xf32> to vector<6x128xf32>
    %20 = arith.subf %14, %19 : vector<6x128xf32>
    %21 = arith.mulf %20, %20 : vector<6x128xf32>
    %cst_10 = arith.constant dense<0.000000e+00> : vector<128xf32>
    %22 = vector.multi_reduction <add>, %21, %cst_10 [0] : vector<6x128xf32> to vector<128xf32>
    %23 = vector.shape_cast %22 : vector<128xf32> to vector<1x128xf32>
    %cst_11 = arith.constant 6.000000e+00 : f32
    %24 = vector.broadcast %cst_11 : f32 to vector<1x128xf32>
    %25 = arith.divf %23, %24 : vector<1x128xf32>
    %26 = vector.broadcast %18 : vector<1x128xf32> to vector<6x128xf32>
    %27 = arith.subf %14, %26 : vector<6x128xf32>
    %cst_12 = arith.constant 9.99999974E-6 : f32
    %28 = vector.broadcast %cst_12 : f32 to vector<1x128xf32>
    %29 = arith.addf %25, %28 : vector<1x128xf32>
    %30 = math.rsqrt %29 : vector<1x128xf32>
    %31 = vector.broadcast %30 : vector<1x128xf32> to vector<6x128xf32>
    %32 = arith.mulf %27, %31 : vector<6x128xf32>
    %33 = vector.broadcast %7 : vector<1x128xf32> to vector<6x128xf32>
    %34 = arith.mulf %32, %33 : vector<6x128xf32>
    %35 = vector.broadcast %8 : vector<1x128xf32> to vector<6x128xf32>
    %36 = arith.addf %34, %35 : vector<6x128xf32>
    %37 = arith.negf %36 : vector<6x128xf32>
    %38 = math.exp %37 : vector<6x128xf32>
    %cst_13 = arith.constant 1.000000e+00 : f32
    %39 = vector.broadcast %cst_13 : f32 to vector<6x128xf32>
    %40 = arith.addf %39, %38 : vector<6x128xf32>
    %41 = arith.divf %39, %40 : vector<6x128xf32>
    %42 = arith.mulf %11, %41 : vector<6x128xf32>
    %43 = arith.mulf %42, %42 : vector<6x128xf32>
    %cst_14 = arith.constant dense<0.000000e+00> : vector<6x2xf32>
    %44 = tpu.matmul %43, %1, %cst_14 {dimension_numbers = #tpu.dot_dimension_numbers<[1], [1], [0], [0], [0, 0, 1, 0], [], []>} : vector<6x128xf32>, vector<2x128xf32>, vector<6x2xf32> -> vector<6x2xf32>
    %cst_15 = arith.constant dense<0.000000e+00> : vector<6x128xf32>
    %45 = tpu.matmul %44, %1, %cst_15 {dimension_numbers = #tpu.dot_dimension_numbers<[1], [0], [0], [1], [0, 0, 1, 1], [], []>} : vector<6x2xf32>, vector<2x128xf32>, vector<6x128xf32> -> vector<6x128xf32>
    %cst_16 = arith.constant 1.000000e-24 : f32
    %46 = vector.broadcast %cst_16 : f32 to vector<6x128xf32>
    %47 = arith.maximumf %45, %46 : vector<6x128xf32>
    %48 = math.rsqrt %47 : vector<6x128xf32>
    %49 = arith.mulf %42, %48 : vector<6x128xf32>
    %c0_17 = arith.constant 0 : index
    %c0_18 = arith.constant 0 : index
    %50 = vector.load %arg1[%c0_17, %c0_18] : memref<2x80xf32, #tpu.memory_space<vmem>>, vector<2x80xf32>
    %c0_19 = arith.constant 0 : index
    %c0_20 = arith.constant 0 : index
    %51 = vector.load %arg5[%c0_19, %c0_20] : memref<80x128xf32, #tpu.memory_space<vmem>>, vector<80x128xf32>
    %52 = vector.extract_strided_slice %0 {offsets = [4, 0], sizes = [1, 128], strides = [1, 1]} : vector<12x128xf32> to vector<1x128xf32>
    %c0_21 = arith.constant 0 : index
    %c0_22 = arith.constant 0 : index
    %53 = vector.load %arg6[%c0_21, %c0_22] : memref<128x128xf32, #tpu.memory_space<vmem>>, vector<128x128xf32>
    %54 = vector.extract_strided_slice %0 {offsets = [5, 0], sizes = [1, 128], strides = [1, 1]} : vector<12x128xf32> to vector<1x128xf32>
    %55 = vector.extract_strided_slice %0 {offsets = [6, 0], sizes = [1, 128], strides = [1, 1]} : vector<12x128xf32> to vector<1x128xf32>
    %56 = vector.extract_strided_slice %0 {offsets = [7, 0], sizes = [1, 128], strides = [1, 1]} : vector<12x128xf32> to vector<1x128xf32>
    %cst_23 = arith.constant dense<0.000000e+00> : vector<2x128xf32>
    %57 = tpu.matmul %50, %51, %cst_23 {dimension_numbers = #tpu.dot_dimension_numbers<[1], [0], [0], [1], [0, 0, 1, 1], [], []>} : vector<2x80xf32>, vector<80x128xf32>, vector<2x128xf32> -> vector<2x128xf32>
    %58 = vector.broadcast %52 : vector<1x128xf32> to vector<2x128xf32>
    %59 = arith.addf %57, %58 : vector<2x128xf32>
    %cst_24 = arith.constant dense<0.000000e+00> : vector<2x128xf32>
    %60 = tpu.matmul %59, %53, %cst_24 {dimension_numbers = #tpu.dot_dimension_numbers<[1], [0], [0], [1], [0, 0, 1, 1], [], []>} : vector<2x128xf32>, vector<128x128xf32>, vector<2x128xf32> -> vector<2x128xf32>
    %61 = vector.broadcast %54 : vector<1x128xf32> to vector<2x128xf32>
    %62 = arith.addf %60, %61 : vector<2x128xf32>
    %cst_25 = arith.constant dense<0.000000e+00> : vector<128xf32>
    %63 = vector.multi_reduction <add>, %62, %cst_25 [0] : vector<2x128xf32> to vector<128xf32>
    %64 = vector.shape_cast %63 : vector<128xf32> to vector<1x128xf32>
    %cst_26 = arith.constant 2.000000e+00 : f32
    %65 = vector.broadcast %cst_26 : f32 to vector<1x128xf32>
    %66 = arith.divf %64, %65 : vector<1x128xf32>
    %67 = vector.broadcast %66 : vector<1x128xf32> to vector<2x128xf32>
    %68 = arith.subf %62, %67 : vector<2x128xf32>
    %69 = arith.mulf %68, %68 : vector<2x128xf32>
    %cst_27 = arith.constant dense<0.000000e+00> : vector<128xf32>
    %70 = vector.multi_reduction <add>, %69, %cst_27 [0] : vector<2x128xf32> to vector<128xf32>
    %71 = vector.shape_cast %70 : vector<128xf32> to vector<1x128xf32>
    %cst_28 = arith.constant 2.000000e+00 : f32
    %72 = vector.broadcast %cst_28 : f32 to vector<1x128xf32>
    %73 = arith.divf %71, %72 : vector<1x128xf32>
    %74 = vector.broadcast %66 : vector<1x128xf32> to vector<2x128xf32>
    %75 = arith.subf %62, %74 : vector<2x128xf32>
    %cst_29 = arith.constant 9.99999974E-6 : f32
    %76 = vector.broadcast %cst_29 : f32 to vector<1x128xf32>
    %77 = arith.addf %73, %76 : vector<1x128xf32>
    %78 = math.rsqrt %77 : vector<1x128xf32>
    %79 = vector.broadcast %78 : vector<1x128xf32> to vector<2x128xf32>
    %80 = arith.mulf %75, %79 : vector<2x128xf32>
    %81 = vector.broadcast %55 : vector<1x128xf32> to vector<2x128xf32>
    %82 = arith.mulf %80, %81 : vector<2x128xf32>
    %83 = vector.broadcast %56 : vector<1x128xf32> to vector<2x128xf32>
    %84 = arith.addf %82, %83 : vector<2x128xf32>
    %85 = arith.negf %84 : vector<2x128xf32>
    %86 = math.exp %85 : vector<2x128xf32>
    %cst_30 = arith.constant 1.000000e+00 : f32
    %87 = vector.broadcast %cst_30 : f32 to vector<2x128xf32>
    %88 = arith.addf %87, %86 : vector<2x128xf32>
    %89 = arith.divf %87, %88 : vector<2x128xf32>
    %90 = arith.mulf %59, %89 : vector<2x128xf32>
    %91 = arith.mulf %90, %90 : vector<2x128xf32>
    %cst_31 = arith.constant dense<0.000000e+00> : vector<2x2xf32>
    %92 = tpu.matmul %91, %1, %cst_31 {dimension_numbers = #tpu.dot_dimension_numbers<[1], [1], [0], [0], [0, 0, 1, 0], [], []>} : vector<2x128xf32>, vector<2x128xf32>, vector<2x2xf32> -> vector<2x2xf32>
    %cst_32 = arith.constant dense<0.000000e+00> : vector<2x128xf32>
    %93 = tpu.matmul %92, %1, %cst_32 {dimension_numbers = #tpu.dot_dimension_numbers<[1], [0], [0], [1], [0, 0, 1, 1], [], []>} : vector<2x2xf32>, vector<2x128xf32>, vector<2x128xf32> -> vector<2x128xf32>
    %cst_33 = arith.constant 1.000000e-24 : f32
    %94 = vector.broadcast %cst_33 : f32 to vector<2x128xf32>
    %95 = arith.maximumf %93, %94 : vector<2x128xf32>
    %96 = math.rsqrt %95 : vector<2x128xf32>
    %97 = arith.mulf %90, %96 : vector<2x128xf32>
    %c0_34 = arith.constant 0 : index
    %c0_35 = arith.constant 0 : index
    %98 = vector.load %arg10[%c0_34, %c0_35] : memref<6x128xf32, #tpu.memory_space<vmem>>, vector<6x128xf32>
    tpu.vector_store %arg10[%c0_34, %c0_35], %49 {strides = array<i32>} : memref<6x128xf32, #tpu.memory_space<vmem>>, vector<6x128xf32>,
    %c0_36 = arith.constant 0 : index
    %c0_37 = arith.constant 0 : index
    %99 = vector.load %arg11[%c0_36, %c0_37] : memref<2x128xf32, #tpu.memory_space<vmem>>, vector<2x128xf32>
    tpu.vector_store %arg11[%c0_36, %c0_37], %97 {strides = array<i32>} : memref<2x128xf32, #tpu.memory_space<vmem>>, vector<2x128xf32>,
    %c0_38 = arith.constant 0 : index
    %c0_39 = arith.constant 0 : index
    %100 = vector.load %arg7[%c0_38, %c0_39] : memref<32x128xf32, #tpu.memory_space<vmem>>, vector<32x128xf32>
    %cst_40 = arith.constant dense<0.000000e+00> : vector<6x128xf32>
    %101 = tpu.matmul %2, %100, %cst_40 {dimension_numbers = #tpu.dot_dimension_numbers<[1], [0], [0], [1], [0, 0, 1, 1], [], []>} : vector<6x32xf32>, vector<32x128xf32>, vector<6x128xf32> -> vector<6x128xf32>
    %102 = vector.extract_strided_slice %0 {offsets = [8, 0], sizes = [1, 128], strides = [1, 1]} : vector<12x128xf32> to vector<1x128xf32>
    %103 = vector.broadcast %102 : vector<1x128xf32> to vector<6x128xf32>
    %104 = arith.addf %101, %103 : vector<6x128xf32>
    %cst_41 = arith.constant dense<0xFF800000> : vector<6xf32>
    %105 = vector.multi_reduction <maximumf>, %104, %cst_41 [1] : vector<6x128xf32> to vector<6xf32>
    %106 = vector.shape_cast %105 : vector<6xf32> to vector<6x1xf32>
    %107 = vector.broadcast %106 : vector<6x1xf32> to vector<6x128xf32>
    %108 = arith.subf %104, %107 : vector<6x128xf32>
    %109 = math.exp %108 : vector<6x128xf32>
    %c0_42 = arith.constant 0 : index
    %c0_43 = arith.constant 0 : index
    %110 = vector.load %arg2[%c0_42, %c0_43] : memref<2x128xf32, #tpu.memory_space<vmem>>, vector<2x128xf32>
    %111 = arith.mulf %49, %109 : vector<6x128xf32>
    %112 = arith.mulf %97, %110 : vector<2x128xf32>
    %cst_44 = arith.constant dense<0.000000e+00> : vector<6x2xf32>
    %113 = tpu.matmul %111, %112, %cst_44 {dimension_numbers = #tpu.dot_dimension_numbers<[1], [1], [0], [0], [0, 0, 1, 0], [], []>} : vector<6x128xf32>, vector<2x128xf32>, vector<6x2xf32> -> vector<6x2xf32>
    %114 = vector.extract_strided_slice %0 {offsets = [9, 0], sizes = [1, 128], strides = [1, 1]} : vector<12x128xf32> to vector<1x128xf32>
    %115 = vector.broadcast %114 : vector<1x128xf32> to vector<2x128xf32>
    %116 = arith.mulf %110, %115 : vector<2x128xf32>
    %cst_45 = arith.constant dense<0.000000e+00> : vector<6x2xf32>
    %117 = tpu.matmul %109, %116, %cst_45 {dimension_numbers = #tpu.dot_dimension_numbers<[1], [1], [0], [0], [0, 0, 1, 0], [], []>} : vector<6x128xf32>, vector<2x128xf32>, vector<6x2xf32> -> vector<6x2xf32>
    %118 = tpu.reciprocal %117 : vector<6x2xf32> -> vector<6x2xf32>
    %119 = arith.mulf %113, %118 : vector<6x2xf32>
    %c0_46 = arith.constant 0 : index
    %c0_47 = arith.constant 0 : index
    %120 = vector.load %arg12[%c0_46, %c0_47] : memref<6x2xf32, #tpu.memory_space<vmem>>, vector<6x2xf32>
    tpu.vector_store %arg12[%c0_46, %c0_47], %119 {strides = array<i32>} : memref<6x2xf32, #tpu.memory_space<vmem>>, vector<6x2xf32>,
    %c0_48 = arith.constant 0 : index
    %c0_49 = arith.constant 0 : index
    %121 = vector.load %arg12[%c0_48, %c0_49] : memref<6x2xf32, #tpu.memory_space<vmem>>, vector<2x2xf32>
    %c2 = arith.constant 2 : index
    %c0_50 = arith.constant 0 : index
    %122 = vector.load %arg12[%c2, %c0_50] : memref<6x2xf32, #tpu.memory_space<vmem>>, vector<2x2xf32>
    %123 = arith.addf %121, %122 : vector<2x2xf32>
    %c4 = arith.constant 4 : index
    %c0_51 = arith.constant 0 : index
    %124 = vector.load %arg12[%c4, %c0_51] : memref<6x2xf32, #tpu.memory_space<vmem>>, vector<2x2xf32>
    %125 = arith.addf %123, %124 : vector<2x2xf32>
    %cst_52 = arith.constant 0.333333343 : f32
    %126 = vector.broadcast %cst_52 : f32 to vector<2x2xf32>
    %127 = arith.mulf %125, %126 : vector<2x2xf32>
    %c0_53 = arith.constant 0 : index
    %c0_54 = arith.constant 0 : index
    %128 = vector.load %arg9[%c0_53, %c0_54] : memref<2x2xf32, #tpu.memory_space<vmem>>, vector<2x2xf32>
    tpu.vector_store %arg9[%c0_53, %c0_54], %127 {strides = array<i32>} : memref<2x2xf32, #tpu.memory_space<vmem>>, vector<2x2xf32>,
    return
  }
}

</mosaic_0001>

<llo_original>
// kernel: _pooling_forward_jit.1
$region0: #{_pooling_forward_jit.1}
  #allocation0 [shape = 'u32[]', space=smem, size = 0x4, offset = 0x4, fixed_abs, tag = 'smem constant byte address 0x4 - core index']
  #allocation1 [shape = 'u32[144,128]{1,0:T(1,128)}', space=vmem, size = 0x12000, scoped, tag = 'internal scratch']
  #allocation2 [shape = 'f32[6,2]{1,0:T(8,128)}', space=vmem, size = 0x1000, scoped, tag = 'scratch operand']
  %s0 = inlined_call_operand.vmem [shape: f32[6,32], index: 0, kind: input, shape index: {}]
  %s1 = inlined_call_operand.vmem [shape: f32[2,80], index: 1, kind: input, shape index: {}]
  %s2 = inlined_call_operand.vmem [shape: f32[2,128], index: 2, kind: input, shape index: {}]
  %s3 = inlined_call_operand.vmem [shape: f32[32,128], index: 3, kind: input, shape index: {}]
  %s4 = inlined_call_operand.hbm [shape: f32[128,128], index: 4, kind: input, shape index: {}]
  %s5 = inlined_call_operand.hbm [shape: f32[80,128], index: 5, kind: input, shape index: {}]
  %s6 = inlined_call_operand.hbm [shape: f32[128,128], index: 6, kind: input, shape index: {}]
  %s7 = inlined_call_operand.hbm [shape: f32[32,128], index: 7, kind: input, shape index: {}]
  %s8 = inlined_call_operand.hbm [shape: f32[12,128], index: 8, kind: input, shape index: {}]
  %s9 = inlined_call_operand.hbm [shape: f32[2,2], index: 9, kind: output, shape index: {0}]
  %s10 = inlined_call_operand.vmem [shape: f32[6,128], index: 10, kind: output, shape index: {1}]
  %s11 = inlined_call_operand.vmem [shape: f32[2,128], index: 11, kind: output, shape index: {2}]
  %12 = xla_tuple %s9, %s10, %s11
  %s13 = sld [smem:[#allocation0]]
  $region82: #{_pooling_forward_jit.1} parent=0
    _
  %s15 = ssub.s32 1, %s13
  %s16 = scalar_select 0, %s15, %s13
  $region1: #{_pooling_forward_jit.1} parent=0
    #allocation3 [shape = 'u8[65536]{0}', space=vmem, size = 0x10000, scoped, tag = 'input window, operand 4, single buffered']
    #allocation4 [shape = 's32[1]{0}', space=sflag, size = 0x4, scoped, tag = 'scoped memory for _pooling_forward_jit.1']
    #allocation5 [shape = 's32[1]{0}', space=sflag, size = 0x4, scoped, tag = 'scoped memory for _pooling_forward_jit.1']
    #allocation6 [shape = 'u8[40960]{0}', space=vmem, size = 0xa000, scoped, tag = 'input window, operand 5, single buffered']
    #allocation7 [shape = 's32[1]{0}', space=sflag, size = 0x4, scoped, tag = 'scoped memory for _pooling_forward_jit.1']
    #allocation8 [shape = 'u8[65536]{0}', space=vmem, size = 0x10000, scoped, tag = 'input window, operand 6, single buffered']
    #allocation9 [shape = 'u8[16384]{0}', space=vmem, size = 0x4000, scoped, tag = 'input window, operand 7, single buffered']
    #allocation10 [shape = 's32[1]{0}', space=sflag, size = 0x4, scoped, tag = 'scoped memory for _pooling_forward_jit.1']
    #allocation11 [shape = 'u8[8192]{0}', space=vmem, size = 0x2000, scoped, tag = 'input window, operand 8, single buffered']
    #allocation12 [shape = 'u8[1024]{0}', space=vmem, size = 0x400, scoped, tag = 'output window, operand 0, single buffered']
    %17 = vsyncpa [#allocation4], 0
    %18 = vsyncpa [#allocation7], 0
    %19 = vsyncpa [#allocation10], 0
    %20 = vsyncpa [#allocation5], 0
    // Predicated region
    $region2: #{_pooling_forward_jit.1} parent=1 // pred_check
      _
    $region3: #{_pooling_forward_jit.1} parent=1 // pred_check_branch
      %22 = sbr.rel (0) target = $region5
    $region4: #{_pooling_forward_jit.1} parent=1 // pred_region
      _
    $region5: #{_pooling_forward_jit.1} parent=1 // pred_fallthru
      _
    // Predicated region
    $region6: #{_pooling_forward_jit.1} parent=1 // pred_check
      _
    $region7: #{_pooling_forward_jit.1} parent=1 // pred_check_branch
      %24 = sbr.rel (0) target = $region9
    $region8: #{_pooling_forward_jit.1} parent=1 // pred_region
      _
    $region9: #{_pooling_forward_jit.1} parent=1 // pred_fallthru
      _
    // Predicated region
    $region10: #{_pooling_forward_jit.1} parent=1 // pred_check
      _
    $region11: #{_pooling_forward_jit.1} parent=1 // pred_check_branch
      %26 = sbr.rel (0) target = $region13
    $region12: #{_pooling_forward_jit.1} parent=1 // pred_region
      _
    $region13: #{_pooling_forward_jit.1} parent=1 // pred_fallthru
      _
    // Predicated region
    $region14: #{_pooling_forward_jit.1} parent=1 // pred_check
      _
    $region15: #{_pooling_forward_jit.1} parent=1 // pred_check_branch
      %28 = sbr.rel (0) target = $region17
    $region16: #{_pooling_forward_jit.1} parent=1 // pred_region
      _
    $region17: #{_pooling_forward_jit.1} parent=1 // pred_fallthru
      _
    // Predicated region
    $region18: #{_pooling_forward_jit.1} parent=1 // pred_check
      _
    $region19: #{_pooling_forward_jit.1} parent=1 // pred_check_branch
      %30 = sbr.rel (0) target = $region21
    $region20: #{_pooling_forward_jit.1} parent=1 // pred_region
      %s32 = ssub.s32 2048, 2048
      %33 = vsyncadd [#allocation4], %s32
      %s34 = sshll.u32 [#allocation3], 4
      %s35 = int_to_ptr.vmem [resolvable:$true] %s34
      %40 = dma.hbm_to_vmem [thread:$0]  %s4, 2048, %s35, [#allocation4], 128, 128, 8
    $region21: #{_pooling_forward_jit.1} parent=1 // pred_fallthru
      _
    // Predicated region
    $region22: #{_pooling_forward_jit.1} parent=1 // pred_check
      _
    $region23: #{_pooling_forward_jit.1} parent=1 // pred_check_branch
      %42 = sbr.rel (0) target = $region25
    $region24: #{_pooling_forward_jit.1} parent=1 // pred_region
      %s44 = ssub.s32 1280, 1280
      %45 = vsyncadd [#allocation7], %s44
      %s46 = sshll.u32 [#allocation6], 4
      %s47 = int_to_ptr.vmem [resolvable:$true] %s46
      %52 = dma.hbm_to_vmem [thread:$0]  %s5, 1280, %s47, [#allocation7], 128, 128, 8
    $region25: #{_pooling_forward_jit.1} parent=1 // pred_fallthru
      _
    // Predicated region
    $region26: #{_pooling_forward_jit.1} parent=1 // pred_check
      _
    $region27: #{_pooling_forward_jit.1} parent=1 // pred_check_branch
      %54 = sbr.rel (0) target = $region29
    $region28: #{_pooling_forward_jit.1} parent=1 // pred_region
      %s56 = ssub.s32 2048, 2048
      %57 = vsyncadd [#allocation7], %s56
      %s58 = sshll.u32 [#allocation8], 4
      %s59 = int_to_ptr.vmem [resolvable:$true] %s58
      %64 = dma.hbm_to_vmem [thread:$0]  %s6, 2048, %s59, [#allocation7], 128, 128, 8
    $region29: #{_pooling_forward_jit.1} parent=1 // pred_fallthru
      _
    // Predicated region
    $region30: #{_pooling_forward_jit.1} parent=1 // pred_check
      _
    $region31: #{_pooling_forward_jit.1} parent=1 // pred_check_branch
      %66 = sbr.rel (0) target = $region33
    $region32: #{_pooling_forward_jit.1} parent=1 // pred_region
      %s68 = ssub.s32 512, 512
      %69 = vsyncadd [#allocation10], %s68
      %s70 = sshll.u32 [#allocation9], 4
      %s71 = int_to_ptr.vmem [resolvable:$true] %s70
      %76 = dma.hbm_to_vmem [thread:$0]  %s7, 512, %s71, [#allocation10], 128, 128, 8
    $region33: #{_pooling_forward_jit.1} parent=1 // pred_fallthru
      _
    // Predicated region
    $region34: #{_pooling_forward_jit.1} parent=1 // pred_check
      _
    $region35: #{_pooling_forward_jit.1} parent=1 // pred_check_branch
      %78 = sbr.rel (0) target = $region37
    $region36: #{_pooling_forward_jit.1} parent=1 // pred_region
      %s80 = ssub.s32 256, 256
      %81 = vsyncadd [#allocation10], %s80
      %s82 = sshll.u32 [#allocation11], 4
      %s83 = int_to_ptr.vmem [resolvable:$true] %s82
      %88 = dma.hbm_to_vmem [thread:$0]  %s8, 256, %s83, [#allocation10], 128, 128, 8
    $region37: #{_pooling_forward_jit.1} parent=1 // pred_fallthru
      _
    // Predicated region
    $region38: #{_pooling_forward_jit.1} parent=1 // pred_check
      _
    $region39: #{_pooling_forward_jit.1} parent=1 // pred_check_branch
      %90 = sbr.rel (0) target = $region41
    $region40: #{_pooling_forward_jit.1} parent=1 // pred_region
      %91 = dma.done [#allocation4], 2048
    $region41: #{_pooling_forward_jit.1} parent=1 // pred_fallthru
      _
    // Predicated region
    $region42: #{_pooling_forward_jit.1} parent=1 // pred_check
      _
    $region43: #{_pooling_forward_jit.1} parent=1 // pred_check_branch
      %93 = sbr.rel (0) target = $region45
    $region44: #{_pooling_forward_jit.1} parent=1 // pred_region
      %94 = dma.done [#allocation7], 1280
    $region45: #{_pooling_forward_jit.1} parent=1 // pred_fallthru
      _
    // Predicated region
    $region46: #{_pooling_forward_jit.1} parent=1 // pred_check
      _
    $region47: #{_pooling_forward_jit.1} parent=1 // pred_check_branch
      %96 = sbr.rel (0) target = $region49
    $region48: #{_pooling_forward_jit.1} parent=1 // pred_region
      %97 = dma.done [#allocation7], 2048
    $region49: #{_pooling_forward_jit.1} parent=1 // pred_fallthru
      _
    // Predicated region
    $region50: #{_pooling_forward_jit.1} parent=1 // pred_check
      _
    $region51: #{_pooling_forward_jit.1} parent=1 // pred_check_branch
      %99 = sbr.rel (0) target = $region53
    $region52: #{_pooling_forward_jit.1} parent=1 // pred_region
      %100 = dma.done [#allocation10], 512
    $region53: #{_pooling_forward_jit.1} parent=1 // pred_fallthru
      _
    // Predicated region
    $region54: #{_pooling_forward_jit.1} parent=1 // pred_check
      _
    $region55: #{_pooling_forward_jit.1} parent=1 // pred_check_branch
      %102 = sbr.rel (0) target = $region57
    $region56: #{_pooling_forward_jit.1} parent=1 // pred_region
      %103 = dma.done [#allocation10], 256
    $region57: #{_pooling_forward_jit.1} parent=1 // pred_fallthru
      _
    %v104 = vld [vmem:[#allocation11] sm:$0xff]
    %v105 = vld [vmem:[#allocation11 + $0x8] sm:$0xf]
    %v106 = vld [vmem:[%s0] sm:$0x3f]
    %v107 = vld [vmem:[%s3] sm:$0xff]
    %v108 = vld [vmem:[%s3 + $0x8] sm:$0xff]
    %v109 = vld [vmem:[%s3 + $0x10] sm:$0xff]
    %v110 = vld [vmem:[%s3 + $0x18] sm:$0xff]
    %v111 = vld [vmem:[#allocation3] sm:$0xff]
    %v112 = vld [vmem:[#allocation3 + $0x8] sm:$0xff]
    %v113 = vld [vmem:[#allocation3 + $0x10] sm:$0xff]
    %v114 = vld [vmem:[#allocation3 + $0x18] sm:$0xff]
    %v115 = vld [vmem:[#allocation3 + $0x20] sm:$0xff]
    %v116 = vld [vmem:[#allocation3 + $0x28] sm:$0xff]
    %v117 = vld [vmem:[#allocation3 + $0x30] sm:$0xff]
    %v118 = vld [vmem:[#allocation3 + $0x38] sm:$0xff]
    %v119 = vld [vmem:[#allocation3 + $0x40] sm:$0xff]
    %v120 = vld [vmem:[#allocation3 + $0x48] sm:$0xff]
    %v121 = vld [vmem:[#allocation3 + $0x50] sm:$0xff]
    %v122 = vld [vmem:[#allocation3 + $0x58] sm:$0xff]
    %v123 = vld [vmem:[#allocation3 + $0x60] sm:$0xff]
    %v124 = vld [vmem:[#allocation3 + $0x68] sm:$0xff]
    %v125 = vld [vmem:[#allocation3 + $0x70] sm:$0xff]
    %v126 = vld [vmem:[#allocation3 + $0x78] sm:$0xff]
    %v127 = vlaneseq
    %v128 = vshrl.u32 %v127, 7
    %v129 = vsub.s32 0, %v128
    %v130 = vrot.slane %v104, %v129
    %vm131 = vcmask 261120
    %v133 = vsel %vm131, %v106, 0
    %135 = vmatprep.subr.mxu0 0.0
    %136 = vmatpush1.msra.mxu0 0.0
    %137 = vmatprep.subr.mxu0 0.0
    %138 = vmatpush1.msra.mxu0 0.0
    %139 = vmatprep.subr.mxu0 0.0
    %140 = vmatpush1.msra.mxu0 0.0
    %141 = vmatprep.subr.mxu0 0.0
    %142 = vmatpush1.msra.mxu0 0.0
    %143 = vmatprep.subr.mxu0 0.0
    %144 = vmatpush1.msra.mxu0 0.0
    %145 = vmatprep.subr.mxu0 0.0
    %146 = vmatpush1.msra.mxu0 0.0
    %147 = vmatprep.subr.mxu0 0.0
    %148 = vmatpush1.msra.mxu0 0.0
    %149 = vmatprep.subr.mxu0 0.0
    %150 = vmatpush1.msra.mxu0 0.0
    %151 = vmatprep.subr.mxu0 0.0
    %152 = vmatpush1.msra.mxu0 0.0
    %153 = vmatprep.subr.mxu0 0.0
    %154 = vmatpush1.msra.mxu0 0.0
    %155 = vmatprep.subr.mxu0 0.0
    %156 = vmatpush1.msra.mxu0 0.0
    %157 = vmatprep.subr.mxu0 0.0
    %158 = vmatpush1.msra.mxu0 0.0
    %159 = vmatprep.subr.mxu0 0.0
    %160 = vmatpush1.msra.mxu0 %v110
    %161 = vmatprep.subr.mxu0 0.0
    %162 = vmatpush1.msra.mxu0 %v109
    %163 = vmatprep.subr.mxu0 0.0
    %164 = vmatpush1.msra.mxu0 %v108
    %165 = vmatprep.subr.mxu0 0.0
    %166 = vmatpush1.msra.mxu0 %v107
    %167 = vmatprep.subr.mxu0 0.0
    %168 = vmatpush2.msra.mxu0 0.0
    %169 = vmatprep.subr.mxu0 0.0
    %170 = vmatpush2.msra.mxu0 0.0
    %171 = vmatprep.subr.mxu0 0.0
    %172 = vmatpush2.msra.mxu0 0.0
    %173 = vmatprep.subr.mxu0 0.0
    %174 = vmatpush2.msra.mxu0 0.0
    %175 = vmatprep.subr.mxu0 0.0
    %176 = vmatpush2.msra.mxu0 0.0
    %177 = vmatprep.subr.mxu0 0.0
    %178 = vmatpush2.msra.mxu0 0.0
    %179 = vmatprep.subr.mxu0 0.0
    %180 = vmatpush2.msra.mxu0 0.0
    %181 = vmatprep.subr.mxu0 0.0
    %182 = vmatpush2.msra.mxu0 0.0
    %183 = vmatprep.subr.mxu0 0.0
    %184 = vmatpush2.msra.mxu0 0.0
    %185 = vmatprep.subr.mxu0 0.0
    %186 = vmatpush2.msra.mxu0 0.0
    %187 = vmatprep.subr.mxu0 0.0
    %188 = vmatpush2.msra.mxu0 0.0
    %189 = vmatprep.subr.mxu0 0.0
    %190 = vmatpush2.msra.mxu0 0.0
    %191 = vmatprep.subr.mxu0 0.0
    %192 = vmatpush2.msra.mxu0 0.0
    %193 = vmatprep.subr.mxu0 0.0
    %194 = vmatpush2.msra.mxu0 0.0
    %195 = vmatprep.subr.mxu0 0.0
    %196 = vmatpush2.msra.mxu0 0.0
    %197 = vmatprep.subr.mxu0 0.0
    %198 = vmatpush2.msra.mxu0 0.0
    %199 = vmatprep.mubr.f32.mxu0 0.0
    %200 = vmatmul.mubr.f32.gmra.mxu0 %v133
    %v201 = vpop.f32.mrf.mxu0
    %v202 = vadd.f32 %v130, %v201
    %v203 = vpop.f32.mrf.mxu0
    %204 = vdwg.mxu0
    %v205 = vlaneseq
    %v206 = vshrl.u32 %v205, 7
    %v207 = vsub.s32 1, %v206
    %v208 = vrot.slane %v104, %v207
    %209 = vmatprep.subr.mxu0 0.0
    %210 = vmatpush1.msra.mxu0 %v126
    %211 = vmatprep.subr.mxu0 0.0
    %212 = vmatpush1.msra.mxu0 %v125
    %213 = vmatprep.subr.mxu0 0.0
    %214 = vmatpush1.msra.mxu0 %v124
    %215 = vmatprep.subr.mxu0 0.0
    %216 = vmatpush1.msra.mxu0 %v123
    %217 = vmatprep.subr.mxu0 0.0
    %218 = vmatpush1.msra.mxu0 %v122
    %219 = vmatprep.subr.mxu0 0.0
    %220 = vmatpush1.msra.mxu0 %v121
    %221 = vmatprep.subr.mxu0 0.0
    %222 = vmatpush1.msra.mxu0 %v120
    %223 = vmatprep.subr.mxu0 0.0
    %224 = vmatpush1.msra.mxu0 %v119
    %225 = vmatprep.subr.mxu0 0.0
    %226 = vmatpush1.msra.mxu0 %v118
    %227 = vmatprep.subr.mxu0 0.0
    %228 = vmatpush1.msra.mxu0 %v117
    %229 = vmatprep.subr.mxu0 0.0
    %230 = vmatpush1.msra.mxu0 %v116
    %231 = vmatprep.subr.mxu0 0.0
    %232 = vmatpush1.msra.mxu0 %v115
    %233 = vmatprep.subr.mxu0 0.0
    %234 = vmatpush1.msra.mxu0 %v114
    %235 = vmatprep.subr.mxu0 0.0
    %236 = vmatpush1.msra.mxu0 %v113
    %237 = vmatprep.subr.mxu0 0.0
    %238 = vmatpush1.msra.mxu0 %v112
    %239 = vmatprep.subr.mxu0 0.0
    %240 = vmatpush1.msra.mxu0 %v111
    %241 = vmatprep.subr.mxu0 0.0
    %242 = vmatpush2.msra.mxu0 0.0
    %243 = vmatprep.subr.mxu0 0.0
    %244 = vmatpush2.msra.mxu0 0.0
    %245 = vmatprep.subr.mxu0 0.0
    %246 = vmatpush2.msra.mxu0 0.0
    %247 = vmatprep.subr.mxu0 0.0
    %248 = vmatpush2.msra.mxu0 0.0
    %249 = vmatprep.subr.mxu0 0.0
    %250 = vmatpush2.msra.mxu0 0.0
    %251 = vmatprep.subr.mxu0 0.0
    %252 = vmatpush2.msra.mxu0 0.0
    %253 = vmatprep.subr.mxu0 0.0
    %254 = vmatpush2.msra.mxu0 0.0
    %255 = vmatprep.subr.mxu0 0.0
    %256 = vmatpush2.msra.mxu0 0.0
    %257 = vmatprep.subr.mxu0 0.0
    %258 = vmatpush2.msra.mxu0 0.0
    %259 = vmatprep.subr.mxu0 0.0
    %260 = vmatpush2.msra.mxu0 0.0
    %261 = vmatprep.subr.mxu0 0.0
    %262 = vmatpush2.msra.mxu0 0.0
    %263 = vmatprep.subr.mxu0 0.0
    %264 = vmatpush2.msra.mxu0 0.0
    %265 = vmatprep.subr.mxu0 0.0
    %266 = vmatpush2.msra.mxu0 0.0
    %267 = vmatprep.subr.mxu0 0.0
    %268 = vmatpush2.msra.mxu0 0.0
    %269 = vmatprep.subr.mxu0 0.0
    %270 = vmatpush2.msra.mxu0 0.0
    %271 = vmatprep.subr.mxu0 0.0
    %272 = vmatpush2.msra.mxu0 0.0
    %273 = vmatprep.mubr.f32.mxu0 0.0
    %274 = vmatmul.mubr.f32.gmra.mxu0 %v202
    %v275 = vpop.f32.mrf.mxu0
    %v276 = vadd.f32 %v208, %v275
    %v277 = vpop.f32.mrf.mxu0
    %278 = vdwg.mxu0
    %vm279 = vcmask 1045504
    %v280 = vsel %vm279, %v276, 0.0
    %v281 = vrot.slane %v280, 4
    %v282 = vadd.f32 %v280, %v281
    %v283 = vrot.slane %v282, 2
    %v284 = vadd.f32 %v282, %v283
    %v285 = vrot.slane %v284, 1
    %v286 = vadd.f32 %v284, %v285
    %v287 = vrcp.pop 6.0
    %v288 = vmul.f32 %v286, %v287
    %v289 = vsub.f32 %v276, %v288
    %v290 = vmul.f32 %v289, %v289
    %v291 = vsel %vm279, %v290, 0.0
    %v292 = vrot.slane %v291, 4
    %v293 = vadd.f32 %v291, %v292
    %v294 = vrot.slane %v293, 2
    %v295 = vadd.f32 %v293, %v294
    %v296 = vrot.slane %v295, 1
    %v297 = vadd.f32 %v295, %v296
    %v298 = vmul.f32 %v297, %v287
    %v299 = vadd.f32 %v298, 1e-05
    %v300 = vrsqrt.pop %v299
    %v301 = vmul.f32 %v289, %v300
    %v302 = vlaneseq
    %v303 = vshrl.u32 %v302, 7
    %v304 = vsub.s32 2, %v303
    %v305 = vrot.slane %v104, %v304
    %v306 = vmul.f32 %v301, %v305
    %v307 = vlaneseq
    %v308 = vshrl.u32 %v307, 7
    %v309 = vsub.s32 3, %v308
    %v310 = vrot.slane %v104, %v309
    %v311 = vadd.f32 %v306, %v310
    %v312 = vxor.u32 %v311, 2147483648
    %v313 = vmul.f32 %v312, 1.442695
    %v314 = vpow.pop %v313
    %v315 = vadd.f32 %v314, 1.0
    %v316 = vrcp.pop %v315
    %v317 = vmul.f32 1.0, %v316
    %v318 = vmul.f32 %v202, %v317
    %v319 = vmul.f32 %v318, %v318
    %v321 = vrot.slane %v105, 2
    %323 = vmatprep.subr.mxu0 0.0
    %324 = vmatpush1.xpose.msra.mxu0 0.0
    %325 = vmatprep.subr.mxu0 0.0
    %326 = vmatpush1.xpose.msra.mxu0 0.0
    %327 = vmatprep.subr.mxu0 0.0
    %328 = vmatpush1.xpose.msra.mxu0 0.0
    %329 = vmatprep.subr.mxu0 0.0
    %330 = vmatpush1.xpose.msra.mxu0 0.0
    %331 = vmatprep.subr.mxu0 0.0
    %332 = vmatpush1.xpose.msra.mxu0 0.0
    %333 = vmatprep.subr.mxu0 0.0
    %334 = vmatpush1.xpose.msra.mxu0 0.0
    %335 = vmatprep.subr.mxu0 0.0
    %336 = vmatpush1.xpose.msra.mxu0 0.0
    %337 = vmatprep.subr.mxu0 0.0
    %338 = vmatpush1.xpose.msra.mxu0 0.0
    %339 = vmatprep.subr.mxu0 0.0
    %340 = vmatpush1.xpose.msra.mxu0 0.0
    %341 = vmatprep.subr.mxu0 0.0
    %342 = vmatpush1.xpose.msra.mxu0 0.0
    %343 = vmatprep.subr.mxu0 0.0
    %344 = vmatpush1.xpose.msra.mxu0 0.0
    %345 = vmatprep.subr.mxu0 0.0
    %346 = vmatpush1.xpose.msra.mxu0 0.0
    %347 = vmatprep.subr.mxu0 0.0
    %348 = vmatpush1.xpose.msra.mxu0 0.0
    %349 = vmatprep.subr.mxu0 0.0
    %350 = vmatpush1.xpose.msra.mxu0 0.0
    %351 = vmatprep.subr.mxu0 0.0
    %352 = vmatpush1.xpose.msra.mxu0 0.0
    %353 = vmatprep.subr.mxu0 0.0
    %354 = vmatpush1.xpose.msra.mxu0 %v321
    %355 = vmatprep.subr.mxu0 0.0
    %356 = vmatpush2.xpose.msra.mxu0 0.0
    %357 = vmatprep.subr.mxu0 0.0
    %358 = vmatpush2.xpose.msra.mxu0 0.0
    %359 = vmatprep.subr.mxu0 0.0
    %360 = vmatpush2.xpose.msra.mxu0 0.0
    %361 = vmatprep.subr.mxu0 0.0
    %362 = vmatpush2.xpose.msra.mxu0 0.0
    %363 = vmatprep.subr.mxu0 0.0
    %364 = vmatpush2.xpose.msra.mxu0 0.0
    %365 = vmatprep.subr.mxu0 0.0
    %366 = vmatpush2.xpose.msra.mxu0 0.0
    %367 = vmatprep.subr.mxu0 0.0
    %368 = vmatpush2.xpose.msra.mxu0 0.0
    %369 = vmatprep.subr.mxu0 0.0
    %370 = vmatpush2.xpose.msra.mxu0 0.0
    %371 = vmatprep.subr.mxu0 0.0
    %372 = vmatpush2.xpose.msra.mxu0 0.0
    %373 = vmatprep.subr.mxu0 0.0
    %374 = vmatpush2.xpose.msra.mxu0 0.0
    %375 = vmatprep.subr.mxu0 0.0
    %376 = vmatpush2.xpose.msra.mxu0 0.0
    %377 = vmatprep.subr.mxu0 0.0
    %378 = vmatpush2.xpose.msra.mxu0 0.0
    %379 = vmatprep.subr.mxu0 0.0
    %380 = vmatpush2.xpose.msra.mxu0 0.0
    %381 = vmatprep.subr.mxu0 0.0
    %382 = vmatpush2.xpose.msra.mxu0 0.0
    %383 = vmatprep.subr.mxu0 0.0
    %384 = vmatpush2.xpose.msra.mxu0 0.0
    %385 = vmatprep.subr.mxu0 0.0
    %386 = vmatpush2.xpose.msra.mxu0 0.0
    %387 = vmatprep.mubr.f32.mxu0 0.0
    %388 = vmatmul.mubr.f32.gmra.mxu0 %v319
    %v389 = vpop.f32.mrf.mxu0
    %v390 = vadd.f32 0.0, %v389
    %v391 = vpop.f32.mrf.mxu0
    %392 = vdwg.mxu0
    %vm393 = vcmask 15360
    %v395 = vsel %vm393, %v390, 0
    %vm397 = vcmask 1041408
    %v398 = vsel %vm397, %v321, 0
    %400 = vmatprep.subr.mxu0 0.0
    %401 = vmatpush1.msra.mxu0 0.0
    %402 = vmatprep.subr.mxu0 0.0
    %403 = vmatpush1.msra.mxu0 0.0
    %404 = vmatprep.subr.mxu0 0.0
    %405 = vmatpush1.msra.mxu0 0.0
    %406 = vmatprep.subr.mxu0 0.0
    %407 = vmatpush1.msra.mxu0 0.0
    %408 = vmatprep.subr.mxu0 0.0
    %409 = vmatpush1.msra.mxu0 0.0
    %410 = vmatprep.subr.mxu0 0.0
    %411 = vmatpush1.msra.mxu0 0.0
    %412 = vmatprep.subr.mxu0 0.0
    %413 = vmatpush1.msra.mxu0 0.0
    %414 = vmatprep.subr.mxu0 0.0
    %415 = vmatpush1.msra.mxu0 0.0
    %416 = vmatprep.subr.mxu0 0.0
    %417 = vmatpush1.msra.mxu0 0.0
    %418 = vmatprep.subr.mxu0 0.0
    %419 = vmatpush1.msra.mxu0 0.0
    %420 = vmatprep.subr.mxu0 0.0
    %421 = vmatpush1.msra.mxu0 0.0
    %422 = vmatprep.subr.mxu0 0.0
    %423 = vmatpush1.msra.mxu0 0.0
    %424 = vmatprep.subr.mxu0 0.0
    %425 = vmatpush1.msra.mxu0 0.0
    %426 = vmatprep.subr.mxu0 0.0
    %427 = vmatpush1.msra.mxu0 0.0
    %428 = vmatprep.subr.mxu0 0.0
    %429 = vmatpush1.msra.mxu0 0.0
    %430 = vmatprep.subr.mxu0 0.0
    %431 = vmatpush1.msra.mxu0 %v398
    %432 = vmatprep.subr.mxu0 0.0
    %433 = vmatpush2.msra.mxu0 0.0
    %434 = vmatprep.subr.mxu0 0.0
    %435 = vmatpush2.msra.mxu0 0.0
    %436 = vmatprep.subr.mxu0 0.0
    %437 = vmatpush2.msra.mxu0 0.0
    %438 = vmatprep.subr.mxu0 0.0
    %439 = vmatpush2.msra.mxu0 0.0
    %440 = vmatprep.subr.mxu0 0.0
    %441 = vmatpush2.msra.mxu0 0.0
    %442 = vmatprep.subr.mxu0 0.0
    %443 = vmatpush2.msra.mxu0 0.0
    %444 = vmatprep.subr.mxu0 0.0
    %445 = vmatpush2.msra.mxu0 0.0
    %446 = vmatprep.subr.mxu0 0.0
    %447 = vmatpush2.msra.mxu0 0.0
    %448 = vmatprep.subr.mxu0 0.0
    %449 = vmatpush2.msra.mxu0 0.0
    %450 = vmatprep.subr.mxu0 0.0
    %451 = vmatpush2.msra.mxu0 0.0
    %452 = vmatprep.subr.mxu0 0.0
    %453 = vmatpush2.msra.mxu0 0.0
    %454 = vmatprep.subr.mxu0 0.0
    %455 = vmatpush2.msra.mxu0 0.0
    %456 = vmatprep.subr.mxu0 0.0
    %457 = vmatpush2.msra.mxu0 0.0
    %458 = vmatprep.subr.mxu0 0.0
    %459 = vmatpush2.msra.mxu0 0.0
    %460 = vmatprep.subr.mxu0 0.0
    %461 = vmatpush2.msra.mxu0 0.0
    %462 = vmatprep.subr.mxu0 0.0
    %463 = vmatpush2.msra.mxu0 0.0
    %464 = vmatprep.mubr.f32.mxu0 0.0
    %465 = vmatmul.mubr.f32.gmra.mxu0 %v395
    %v466 = vpop.f32.mrf.mxu0
    %v467 = vadd.f32 0.0, %v466
    %v468 = vpop.f32.mrf.mxu0
    %469 = vdwg.mxu0
    %v470 = vmax.f32 %v467, 1e-24
    %v471 = vrsqrt.pop %v470
    %v472 = vmul.f32 %v318, %v471
    %v473 = vld [vmem:[%s1] sm:$0x3]
    %v474 = vld [vmem:[#allocation6] sm:$0xff]
    %v475 = vld [vmem:[#allocation6 + $0x8] sm:$0xff]
    %v476 = vld [vmem:[#allocation6 + $0x10] sm:$0xff]
    %v477 = vld [vmem:[#allocation6 + $0x18] sm:$0xff]
    %v478 = vld [vmem:[#allocation6 + $0x20] sm:$0xff]
    %v479 = vld [vmem:[#allocation6 + $0x28] sm:$0xff]
    %v480 = vld [vmem:[#allocation6 + $0x30] sm:$0xff]
    %v481 = vld [vmem:[#allocation6 + $0x38] sm:$0xff]
    %v482 = vld [vmem:[#allocation6 + $0x40] sm:$0xff]
    %v483 = vld [vmem:[#allocation6 + $0x48] sm:$0xff]
    %v484 = vld [vmem:[#allocation8] sm:$0xff]
    %v485 = vld [vmem:[#allocation8 + $0x8] sm:$0xff]
    %v486 = vld [vmem:[#allocation8 + $0x10] sm:$0xff]
    %v487 = vld [vmem:[#allocation8 + $0x18] sm:$0xff]
    %v488 = vld [vmem:[#allocation8 + $0x20] sm:$0xff]
    %v489 = vld [vmem:[#allocation8 + $0x28] sm:$0xff]
    %v490 = vld [vmem:[#allocation8 + $0x30] sm:$0xff]
    %v491 = vld [vmem:[#allocation8 + $0x38] sm:$0xff]
    %v492 = vld [vmem:[#allocation8 + $0x40] sm:$0xff]
    %v493 = vld [vmem:[#allocation8 + $0x48] sm:$0xff]
    %v494 = vld [vmem:[#allocation8 + $0x50] sm:$0xff]
    %v495 = vld [vmem:[#allocation8 + $0x58] sm:$0xff]
    %v496 = vld [vmem:[#allocation8 + $0x60] sm:$0xff]
    %v497 = vld [vmem:[#allocation8 + $0x68] sm:$0xff]
    %v498 = vld [vmem:[#allocation8 + $0x70] sm:$0xff]
    %v499 = vld [vmem:[#allocation8 + $0x78] sm:$0xff]
    %v500 = vlaneseq
    %v501 = vshrl.u32 %v500, 7
    %v502 = vsub.s32 4, %v501
    %v503 = vrot.slane %v104, %v502
    %vm504 = vcmask 654336
    %v506 = vsel %vm504, %v473, 0
    %508 = vmatprep.subr.mxu0 0.0
    %509 = vmatpush1.msra.mxu0 0.0
    %510 = vmatprep.subr.mxu0 0.0
    %511 = vmatpush1.msra.mxu0 0.0
    %512 = vmatprep.subr.mxu0 0.0
    %513 = vmatpush1.msra.mxu0 0.0
    %514 = vmatprep.subr.mxu0 0.0
    %515 = vmatpush1.msra.mxu0 0.0
    %516 = vmatprep.subr.mxu0 0.0
    %517 = vmatpush1.msra.mxu0 0.0
    %518 = vmatprep.subr.mxu0 0.0
    %519 = vmatpush1.msra.mxu0 0.0
    %520 = vmatprep.subr.mxu0 0.0
    %521 = vmatpush1.msra.mxu0 %v483
    %522 = vmatprep.subr.mxu0 0.0
    %523 = vmatpush1.msra.mxu0 %v482
    %524 = vmatprep.subr.mxu0 0.0
    %525 = vmatpush1.msra.mxu0 %v481
    %526 = vmatprep.subr.mxu0 0.0
    %527 = vmatpush1.msra.mxu0 %v480
    %528 = vmatprep.subr.mxu0 0.0
    %529 = vmatpush1.msra.mxu0 %v479
    %530 = vmatprep.subr.mxu0 0.0
    %531 = vmatpush1.msra.mxu0 %v478
    %532 = vmatprep.subr.mxu0 0.0
    %533 = vmatpush1.msra.mxu0 %v477
    %534 = vmatprep.subr.mxu0 0.0
    %535 = vmatpush1.msra.mxu0 %v476
    %536 = vmatprep.subr.mxu0 0.0
    %537 = vmatpush1.msra.mxu0 %v475
    %538 = vmatprep.subr.mxu0 0.0
    %539 = vmatpush1.msra.mxu0 %v474
    %540 = vmatprep.subr.mxu0 0.0
    %541 = vmatpush2.msra.mxu0 0.0
    %542 = vmatprep.subr.mxu0 0.0
    %543 = vmatpush2.msra.mxu0 0.0
    %544 = vmatprep.subr.mxu0 0.0
    %545 = vmatpush2.msra.mxu0 0.0
    %546 = vmatprep.subr.mxu0 0.0
    %547 = vmatpush2.msra.mxu0 0.0
    %548 = vmatprep.subr.mxu0 0.0
    %549 = vmatpush2.msra.mxu0 0.0
    %550 = vmatprep.subr.mxu0 0.0
    %551 = vmatpush2.msra.mxu0 0.0
    %552 = vmatprep.subr.mxu0 0.0
    %553 = vmatpush2.msra.mxu0 0.0
    %554 = vmatprep.subr.mxu0 0.0
    %555 = vmatpush2.msra.mxu0 0.0
    %556 = vmatprep.subr.mxu0 0.0
    %557 = vmatpush2.msra.mxu0 0.0
    %558 = vmatprep.subr.mxu0 0.0
    %559 = vmatpush2.msra.mxu0 0.0
    %560 = vmatprep.subr.mxu0 0.0
    %561 = vmatpush2.msra.mxu0 0.0
    %562 = vmatprep.subr.mxu0 0.0
    %563 = vmatpush2.msra.mxu0 0.0
    %564 = vmatprep.subr.mxu0 0.0
    %565 = vmatpush2.msra.mxu0 0.0
    %566 = vmatprep.subr.mxu0 0.0
    %567 = vmatpush2.msra.mxu0 0.0
    %568 = vmatprep.subr.mxu0 0.0
    %569 = vmatpush2.msra.mxu0 0.0
    %570 = vmatprep.subr.mxu0 0.0
    %571 = vmatpush2.msra.mxu0 0.0
    %572 = vmatprep.mubr.f32.mxu0 0.0
    %573 = vmatmul.mubr.f32.gmra.mxu0 %v506
    %v574 = vpop.f32.mrf.mxu0
    %v575 = vadd.f32 %v503, %v574
    %v576 = vpop.f32.mrf.mxu0
    %577 = vdwg.mxu0
    %v578 = vlaneseq
    %v579 = vshrl.u32 %v578, 7
    %v580 = vsub.s32 5, %v579
    %v581 = vrot.slane %v104, %v580
    %582 = vmatprep.subr.mxu0 0.0
    %583 = vmatpush1.msra.mxu0 %v499
    %584 = vmatprep.subr.mxu0 0.0
    %585 = vmatpush1.msra.mxu0 %v498
    %586 = vmatprep.subr.mxu0 0.0
    %587 = vmatpush1.msra.mxu0 %v497
    %588 = vmatprep.subr.mxu0 0.0
    %589 = vmatpush1.msra.mxu0 %v496
    %590 = vmatprep.subr.mxu0 0.0
    %591 = vmatpush1.msra.mxu0 %v495
    %592 = vmatprep.subr.mxu0 0.0
    %593 = vmatpush1.msra.mxu0 %v494
    %594 = vmatprep.subr.mxu0 0.0
    %595 = vmatpush1.msra.mxu0 %v493
    %596 = vmatprep.subr.mxu0 0.0
    %597 = vmatpush1.msra.mxu0 %v492
    %598 = vmatprep.subr.mxu0 0.0
    %599 = vmatpush1.msra.mxu0 %v491
    %600 = vmatprep.subr.mxu0 0.0
    %601 = vmatpush1.msra.mxu0 %v490
    %602 = vmatprep.subr.mxu0 0.0
    %603 = vmatpush1.msra.mxu0 %v489
    %604 = vmatprep.subr.mxu0 0.0
    %605 = vmatpush1.msra.mxu0 %v488
    %606 = vmatprep.subr.mxu0 0.0
    %607 = vmatpush1.msra.mxu0 %v487
    %608 = vmatprep.subr.mxu0 0.0
    %609 = vmatpush1.msra.mxu0 %v486
    %610 = vmatprep.subr.mxu0 0.0
    %611 = vmatpush1.msra.mxu0 %v485
    %612 = vmatprep.subr.mxu0 0.0
    %613 = vmatpush1.msra.mxu0 %v484
    %614 = vmatprep.subr.mxu0 0.0
    %615 = vmatpush2.msra.mxu0 0.0
    %616 = vmatprep.subr.mxu0 0.0
    %617 = vmatpush2.msra.mxu0 0.0
    %618 = vmatprep.subr.mxu0 0.0
    %619 = vmatpush2.msra.mxu0 0.0
    %620 = vmatprep.subr.mxu0 0.0
    %621 = vmatpush2.msra.mxu0 0.0
    %622 = vmatprep.subr.mxu0 0.0
    %623 = vmatpush2.msra.mxu0 0.0
    %624 = vmatprep.subr.mxu0 0.0
    %625 = vmatpush2.msra.mxu0 0.0
    %626 = vmatprep.subr.mxu0 0.0
    %627 = vmatpush2.msra.mxu0 0.0
    %628 = vmatprep.subr.mxu0 0.0
    %629 = vmatpush2.msra.mxu0 0.0
    %630 = vmatprep.subr.mxu0 0.0
    %631 = vmatpush2.msra.mxu0 0.0
    %632 = vmatprep.subr.mxu0 0.0
    %633 = vmatpush2.msra.mxu0 0.0
    %634 = vmatprep.subr.mxu0 0.0
    %635 = vmatpush2.msra.mxu0 0.0
    %636 = vmatprep.subr.mxu0 0.0
    %637 = vmatpush2.msra.mxu0 0.0
    %638 = vmatprep.subr.mxu0 0.0
    %639 = vmatpush2.msra.mxu0 0.0
    %640 = vmatprep.subr.mxu0 0.0
    %641 = vmatpush2.msra.mxu0 0.0
    %642 = vmatprep.subr.mxu0 0.0
    %643 = vmatpush2.msra.mxu0 0.0
    %644 = vmatprep.subr.mxu0 0.0
    %645 = vmatpush2.msra.mxu0 0.0
    %646 = vmatprep.mubr.f32.mxu0 0.0
    %647 = vmatmul.mubr.f32.gmra.mxu0 %v575
    %v648 = vpop.f32.mrf.mxu0
    %v649 = vadd.f32 %v581, %v648
    %v650 = vpop.f32.mrf.mxu0
    %651 = vdwg.mxu0
    %v652 = vsel %vm397, %v649, 0.0
    %v653 = vrot.slane %v652, 4
    %v654 = vadd.f32 %v652, %v653
    %v655 = vrot.slane %v654, 2
    %v656 = vadd.f32 %v654, %v655
    %v657 = vrot.slane %v656, 1
    %v658 = vadd.f32 %v656, %v657
    %v659 = vrcp.pop 2.0
    %v660 = vmul.f32 %v658, %v659
    %v661 = vsub.f32 %v649, %v660
    %v662 = vmul.f32 %v661, %v661
    %v663 = vsel %vm397, %v662, 0.0
    %v664 = vrot.slane %v663, 4
    %v665 = vadd.f32 %v663, %v664
    %v666 = vrot.slane %v665, 2
    %v667 = vadd.f32 %v665, %v666
    %v668 = vrot.slane %v667, 1
    %v669 = vadd.f32 %v667, %v668
    %v670 = vmul.f32 %v669, %v659
    %v671 = vadd.f32 %v670, 1e-05
    %v672 = vrsqrt.pop %v671
    %v673 = vmul.f32 %v661, %v672
    %v674 = vlaneseq
    %v675 = vshrl.u32 %v674, 7
    %v676 = vsub.s32 6, %v675
    %v677 = vrot.slane %v104, %v676
    %v678 = vmul.f32 %v673, %v677
    %v679 = vlaneseq
    %v680 = vshrl.u32 %v679, 7
    %v681 = vsub.s32 7, %v680
    %v682 = vrot.slane %v104, %v681
    %v683 = vadd.f32 %v678, %v682
    %v684 = vxor.u32 %v683, 2147483648
    %v685 = vmul.f32 %v684, 1.442695
    %v686 = vpow.pop %v685
    %v687 = vadd.f32 %v686, 1.0
    %v688 = vrcp.pop %v687
    %v689 = vmul.f32 1.0, %v688
    %v690 = vmul.f32 %v575, %v689
    %v691 = vmul.f32 %v690, %v690
    %692 = vmatprep.subr.mxu0 0.0
    %693 = vmatpush1.xpose.msra.mxu0 0.0
    %694 = vmatprep.subr.mxu0 0.0
    %695 = vmatpush1.xpose.msra.mxu0 0.0
    %696 = vmatprep.subr.mxu0 0.0
    %697 = vmatpush1.xpose.msra.mxu0 0.0
    %698 = vmatprep.subr.mxu0 0.0
    %699 = vmatpush1.xpose.msra.mxu0 0.0
    %700 = vmatprep.subr.mxu0 0.0
    %701 = vmatpush1.xpose.msra.mxu0 0.0
    %702 = vmatprep.subr.mxu0 0.0
    %703 = vmatpush1.xpose.msra.mxu0 0.0
    %704 = vmatprep.subr.mxu0 0.0
    %705 = vmatpush1.xpose.msra.mxu0 0.0
    %706 = vmatprep.subr.mxu0 0.0
    %707 = vmatpush1.xpose.msra.mxu0 0.0
    %708 = vmatprep.subr.mxu0 0.0
    %709 = vmatpush1.xpose.msra.mxu0 0.0
    %710 = vmatprep.subr.mxu0 0.0
    %711 = vmatpush1.xpose.msra.mxu0 0.0
    %712 = vmatprep.subr.mxu0 0.0
    %713 = vmatpush1.xpose.msra.mxu0 0.0
    %714 = vmatprep.subr.mxu0 0.0
    %715 = vmatpush1.xpose.msra.mxu0 0.0
    %716 = vmatprep.subr.mxu0 0.0
    %717 = vmatpush1.xpose.msra.mxu0 0.0
    %718 = vmatprep.subr.mxu0 0.0
    %719 = vmatpush1.xpose.msra.mxu0 0.0
    %720 = vmatprep.subr.mxu0 0.0
    %721 = vmatpush1.xpose.msra.mxu0 0.0
    %722 = vmatprep.subr.mxu0 0.0
    %723 = vmatpush1.xpose.msra.mxu0 %v321
    %724 = vmatprep.subr.mxu0 0.0
    %725 = vmatpush2.xpose.msra.mxu0 0.0
    %726 = vmatprep.subr.mxu0 0.0
    %727 = vmatpush2.xpose.msra.mxu0 0.0
    %728 = vmatprep.subr.mxu0 0.0
    %729 = vmatpush2.xpose.msra.mxu0 0.0
    %730 = vmatprep.subr.mxu0 0.0
    %731 = vmatpush2.xpose.msra.mxu0 0.0
    %732 = vmatprep.subr.mxu0 0.0
    %733 = vmatpush2.xpose.msra.mxu0 0.0
    %734 = vmatprep.subr.mxu0 0.0
    %735 = vmatpush2.xpose.msra.mxu0 0.0
    %736 = vmatprep.subr.mxu0 0.0
    %737 = vmatpush2.xpose.msra.mxu0 0.0
    %738 = vmatprep.subr.mxu0 0.0
    %739 = vmatpush2.xpose.msra.mxu0 0.0
    %740 = vmatprep.subr.mxu0 0.0
    %741 = vmatpush2.xpose.msra.mxu0 0.0
    %742 = vmatprep.subr.mxu0 0.0
    %743 = vmatpush2.xpose.msra.mxu0 0.0
    %744 = vmatprep.subr.mxu0 0.0
    %745 = vmatpush2.xpose.msra.mxu0 0.0
    %746 = vmatprep.subr.mxu0 0.0
    %747 = vmatpush2.xpose.msra.mxu0 0.0
    %748 = vmatprep.subr.mxu0 0.0
    %749 = vmatpush2.xpose.msra.mxu0 0.0
    %750 = vmatprep.subr.mxu0 0.0
    %751 = vmatpush2.xpose.msra.mxu0 0.0
    %752 = vmatprep.subr.mxu0 0.0
    %753 = vmatpush2.xpose.msra.mxu0 0.0
    %754 = vmatprep.subr.mxu0 0.0
    %755 = vmatpush2.xpose.msra.mxu0 0.0
    %756 = vmatprep.mubr.f32.mxu0 0.0
    %757 = vmatmul.mubr.f32.gmra.mxu0 %v691
    %v758 = vpop.f32.mrf.mxu0
    %v759 = vadd.f32 0.0, %v758
    %v760 = vpop.f32.mrf.mxu0
    %761 = vdwg.mxu0
    %v763 = vsel %vm393, %v759, 0
    %765 = vmatprep.subr.mxu0 0.0
    %766 = vmatpush1.msra.mxu0 0.0
    %767 = vmatprep.subr.mxu0 0.0
    %768 = vmatpush1.msra.mxu0 0.0
    %769 = vmatprep.subr.mxu0 0.0
    %770 = vmatpush1.msra.mxu0 0.0
    %771 = vmatprep.subr.mxu0 0.0
    %772 = vmatpush1.msra.mxu0 0.0
    %773 = vmatprep.subr.mxu0 0.0
    %774 = vmatpush1.msra.mxu0 0.0
    %775 = vmatprep.subr.mxu0 0.0
    %776 = vmatpush1.msra.mxu0 0.0
    %777 = vmatprep.subr.mxu0 0.0
    %778 = vmatpush1.msra.mxu0 0.0
    %779 = vmatprep.subr.mxu0 0.0
    %780 = vmatpush1.msra.mxu0 0.0
    %781 = vmatprep.subr.mxu0 0.0
    %782 = vmatpush1.msra.mxu0 0.0
    %783 = vmatprep.subr.mxu0 0.0
    %784 = vmatpush1.msra.mxu0 0.0
    %785 = vmatprep.subr.mxu0 0.0
    %786 = vmatpush1.msra.mxu0 0.0
    %787 = vmatprep.subr.mxu0 0.0
    %788 = vmatpush1.msra.mxu0 0.0
    %789 = vmatprep.subr.mxu0 0.0
    %790 = vmatpush1.msra.mxu0 0.0
    %791 = vmatprep.subr.mxu0 0.0
    %792 = vmatpush1.msra.mxu0 0.0
    %793 = vmatprep.subr.mxu0 0.0
    %794 = vmatpush1.msra.mxu0 0.0
    %795 = vmatprep.subr.mxu0 0.0
    %796 = vmatpush1.msra.mxu0 %v398
    %797 = vmatprep.subr.mxu0 0.0
    %798 = vmatpush2.msra.mxu0 0.0
    %799 = vmatprep.subr.mxu0 0.0
    %800 = vmatpush2.msra.mxu0 0.0
    %801 = vmatprep.subr.mxu0 0.0
    %802 = vmatpush2.msra.mxu0 0.0
    %803 = vmatprep.subr.mxu0 0.0
    %804 = vmatpush2.msra.mxu0 0.0
    %805 = vmatprep.subr.mxu0 0.0
    %806 = vmatpush2.msra.mxu0 0.0
    %807 = vmatprep.subr.mxu0 0.0
    %808 = vmatpush2.msra.mxu0 0.0
    %809 = vmatprep.subr.mxu0 0.0
    %810 = vmatpush2.msra.mxu0 0.0
    %811 = vmatprep.subr.mxu0 0.0
    %812 = vmatpush2.msra.mxu0 0.0
    %813 = vmatprep.subr.mxu0 0.0
    %814 = vmatpush2.msra.mxu0 0.0
    %815 = vmatprep.subr.mxu0 0.0
    %816 = vmatpush2.msra.mxu0 0.0
    %817 = vmatprep.subr.mxu0 0.0
    %818 = vmatpush2.msra.mxu0 0.0
    %819 = vmatprep.subr.mxu0 0.0
    %820 = vmatpush2.msra.mxu0 0.0
    %821 = vmatprep.subr.mxu0 0.0
    %822 = vmatpush2.msra.mxu0 0.0
    %823 = vmatprep.subr.mxu0 0.0
    %824 = vmatpush2.msra.mxu0 0.0
    %825 = vmatprep.subr.mxu0 0.0
    %826 = vmatpush2.msra.mxu0 0.0
    %827 = vmatprep.subr.mxu0 0.0
    %828 = vmatpush2.msra.mxu0 0.0
    %829 = vmatprep.mubr.f32.mxu0 0.0
    %830 = vmatmul.mubr.f32.gmra.mxu0 %v763
    %v831 = vpop.f32.mrf.mxu0
    %v832 = vadd.f32 0.0, %v831
    %v833 = vpop.f32.mrf.mxu0
    %834 = vdwg.mxu0
    %v835 = vmax.f32 %v832, 1e-24
    %v836 = vrsqrt.pop %v835
    %v837 = vmul.f32 %v690, %v836
    %838 = vst [vmem:[%s10] sm:$0x3f] %v472
    %839 = vst [vmem:[%s11] sm:$0x3] %v837
    %v840 = vld [vmem:[#allocation9] sm:$0xff]
    %v841 = vld [vmem:[#allocation9 + $0x8] sm:$0xff]
    %v842 = vld [vmem:[#allocation9 + $0x10] sm:$0xff]
    %v843 = vld [vmem:[#allocation9 + $0x18] sm:$0xff]
    %v844 = vlaneseq
    %v845 = vshrl.u32 %v844, 7
    %v846 = vsub.s32 0, %v845
    %v847 = vrot.slane %v105, %v846
    %848 = vmatprep.subr.mxu0 0.0
    %849 = vmatpush1.msra.mxu0 0.0
    %850 = vmatprep.subr.mxu0 0.0
    %851 = vmatpush1.msra.mxu0 0.0
    %852 = vmatprep.subr.mxu0 0.0
    %853 = vmatpush1.msra.mxu0 0.0
    %854 = vmatprep.subr.mxu0 0.0
    %855 = vmatpush1.msra.mxu0 0.0
    %856 = vmatprep.subr.mxu0 0.0
    %857 = vmatpush1.msra.mxu0 0.0
    %858 = vmatprep.subr.mxu0 0.0
    %859 = vmatpush1.msra.mxu0 0.0
    %860 = vmatprep.subr.mxu0 0.0
    %861 = vmatpush1.msra.mxu0 0.0
    %862 = vmatprep.subr.mxu0 0.0
    %863 = vmatpush1.msra.mxu0 0.0
    %864 = vmatprep.subr.mxu0 0.0
    %865 = vmatpush1.msra.mxu0 0.0
    %866 = vmatprep.subr.mxu0 0.0
    %867 = vmatpush1.msra.mxu0 0.0
    %868 = vmatprep.subr.mxu0 0.0
    %869 = vmatpush1.msra.mxu0 0.0
    %870 = vmatprep.subr.mxu0 0.0
    %871 = vmatpush1.msra.mxu0 0.0
    %872 = vmatprep.subr.mxu0 0.0
    %873 = vmatpush1.msra.mxu0 %v843
    %874 = vmatprep.subr.mxu0 0.0
    %875 = vmatpush1.msra.mxu0 %v842
    %876 = vmatprep.subr.mxu0 0.0
    %877 = vmatpush1.msra.mxu0 %v841
    %878 = vmatprep.subr.mxu0 0.0
    %879 = vmatpush1.msra.mxu0 %v840
    %880 = vmatprep.subr.mxu0 0.0
    %881 = vmatpush2.msra.mxu0 0.0
    %882 = vmatprep.subr.mxu0 0.0
    %883 = vmatpush2.msra.mxu0 0.0
    %884 = vmatprep.subr.mxu0 0.0
    %885 = vmatpush2.msra.mxu0 0.0
    %886 = vmatprep.subr.mxu0 0.0
    %887 = vmatpush2.msra.mxu0 0.0
    %888 = vmatprep.subr.mxu0 0.0
    %889 = vmatpush2.msra.mxu0 0.0
    %890 = vmatprep.subr.mxu0 0.0
    %891 = vmatpush2.msra.mxu0 0.0
    %892 = vmatprep.subr.mxu0 0.0
    %893 = vmatpush2.msra.mxu0 0.0
    %894 = vmatprep.subr.mxu0 0.0
    %895 = vmatpush2.msra.mxu0 0.0
    %896 = vmatprep.subr.mxu0 0.0
    %897 = vmatpush2.msra.mxu0 0.0
    %898 = vmatprep.subr.mxu0 0.0
    %899 = vmatpush2.msra.mxu0 0.0
    %900 = vmatprep.subr.mxu0 0.0
    %901 = vmatpush2.msra.mxu0 0.0
    %902 = vmatprep.subr.mxu0 0.0
    %903 = vmatpush2.msra.mxu0 0.0
    %904 = vmatprep.subr.mxu0 0.0
    %905 = vmatpush2.msra.mxu0 0.0
    %906 = vmatprep.subr.mxu0 0.0
    %907 = vmatpush2.msra.mxu0 0.0
    %908 = vmatprep.subr.mxu0 0.0
    %909 = vmatpush2.msra.mxu0 0.0
    %910 = vmatprep.subr.mxu0 0.0
    %911 = vmatpush2.msra.mxu0 0.0
    %912 = vmatprep.mubr.f32.mxu0 0.0
    %913 = vmatmul.mubr.f32.gmra.mxu0 %v133
    %v914 = vpop.f32.mrf.mxu0
    %v915 = vadd.f32 %v847, %v914
    %v916 = vpop.f32.mrf.mxu0
    %917 = vdwg.mxu0
    %v918 = vsel %vm279, %v915, -inf
    %919 = vmax.xlane.f32.xlu0 %v918
    %v920 = vpop.xlane.xlu0 %919
    %v921 = vsub.f32 %v915, %v920
    %v922 = vmul.f32 %v921, 1.442695
    %v923 = vpow.pop %v922
    %v924 = vld [vmem:[%s2] sm:$0x3]
    %v925 = vmul.f32 %v472, %v923
    %v926 = vmul.f32 %v837, %v924
    %927 = vmatprep.subr.mxu0 0.0
    %928 = vmatpush1.xpose.msra.mxu0 0.0
    %929 = vmatprep.subr.mxu0 0.0
    %930 = vmatpush1.xpose.msra.mxu0 0.0
    %931 = vmatprep.subr.mxu0 0.0
    %932 = vmatpush1.xpose.msra.mxu0 0.0
    %933 = vmatprep.subr.mxu0 0.0
    %934 = vmatpush1.xpose.msra.mxu0 0.0
    %935 = vmatprep.subr.mxu0 0.0
    %936 = vmatpush1.xpose.msra.mxu0 0.0
    %937 = vmatprep.subr.mxu0 0.0
    %938 = vmatpush1.xpose.msra.mxu0 0.0
    %939 = vmatprep.subr.mxu0 0.0
    %940 = vmatpush1.xpose.msra.mxu0 0.0
    %941 = vmatprep.subr.mxu0 0.0
    %942 = vmatpush1.xpose.msra.mxu0 0.0
    %943 = vmatprep.subr.mxu0 0.0
    %944 = vmatpush1.xpose.msra.mxu0 0.0
    %945 = vmatprep.subr.mxu0 0.0
    %946 = vmatpush1.xpose.msra.mxu0 0.0
    %947 = vmatprep.subr.mxu0 0.0
    %948 = vmatpush1.xpose.msra.mxu0 0.0
    %949 = vmatprep.subr.mxu0 0.0
    %950 = vmatpush1.xpose.msra.mxu0 0.0
    %951 = vmatprep.subr.mxu0 0.0
    %952 = vmatpush1.xpose.msra.mxu0 0.0
    %953 = vmatprep.subr.mxu0 0.0
    %954 = vmatpush1.xpose.msra.mxu0 0.0
    %955 = vmatprep.subr.mxu0 0.0
    %956 = vmatpush1.xpose.msra.mxu0 0.0
    %957 = vmatprep.subr.mxu0 0.0
    %958 = vmatpush1.xpose.msra.mxu0 %v926
    %959 = vmatprep.subr.mxu0 0.0
    %960 = vmatpush2.xpose.msra.mxu0 0.0
    %961 = vmatprep.subr.mxu0 0.0
    %962 = vmatpush2.xpose.msra.mxu0 0.0
    %963 = vmatprep.subr.mxu0 0.0
    %964 = vmatpush2.xpose.msra.mxu0 0.0
    %965 = vmatprep.subr.mxu0 0.0
    %966 = vmatpush2.xpose.msra.mxu0 0.0
    %967 = vmatprep.subr.mxu0 0.0
    %968 = vmatpush2.xpose.msra.mxu0 0.0
    %969 = vmatprep.subr.mxu0 0.0
    %970 = vmatpush2.xpose.msra.mxu0 0.0
    %971 = vmatprep.subr.mxu0 0.0
    %972 = vmatpush2.xpose.msra.mxu0 0.0
    %973 = vmatprep.subr.mxu0 0.0
    %974 = vmatpush2.xpose.msra.mxu0 0.0
    %975 = vmatprep.subr.mxu0 0.0
    %976 = vmatpush2.xpose.msra.mxu0 0.0
    %977 = vmatprep.subr.mxu0 0.0
    %978 = vmatpush2.xpose.msra.mxu0 0.0
    %979 = vmatprep.subr.mxu0 0.0
    %980 = vmatpush2.xpose.msra.mxu0 0.0
    %981 = vmatprep.subr.mxu0 0.0
    %982 = vmatpush2.xpose.msra.mxu0 0.0
    %983 = vmatprep.subr.mxu0 0.0
    %984 = vmatpush2.xpose.msra.mxu0 0.0
    %985 = vmatprep.subr.mxu0 0.0
    %986 = vmatpush2.xpose.msra.mxu0 0.0
    %987 = vmatprep.subr.mxu0 0.0
    %988 = vmatpush2.xpose.msra.mxu0 0.0
    %989 = vmatprep.subr.mxu0 0.0
    %990 = vmatpush2.xpose.msra.mxu0 0.0
    %991 = vmatprep.mubr.f32.mxu0 0.0
    %992 = vmatmul.mubr.f32.gmra.mxu0 %v925
    %v993 = vpop.f32.mrf.mxu0
    %v994 = vadd.f32 0.0, %v993
    %v995 = vpop.f32.mrf.mxu0
    %996 = vdwg.mxu0
    %v997 = vlaneseq
    %v998 = vshrl.u32 %v997, 7
    %v999 = vsub.s32 1, %v998
    %v1000 = vrot.slane %v105, %v999
    %v1001 = vmul.f32 %v924, %v1000
    %1002 = vmatprep.subr.mxu0 0.0
    %1003 = vmatpush1.xpose.msra.mxu0 0.0
    %1004 = vmatprep.subr.mxu0 0.0
    %1005 = vmatpush1.xpose.msra.mxu0 0.0
    %1006 = vmatprep.subr.mxu0 0.0
    %1007 = vmatpush1.xpose.msra.mxu0 0.0
    %1008 = vmatprep.subr.mxu0 0.0
    %1009 = vmatpush1.xpose.msra.mxu0 0.0
    %1010 = vmatprep.subr.mxu0 0.0
    %1011 = vmatpush1.xpose.msra.mxu0 0.0
    %1012 = vmatprep.subr.mxu0 0.0
    %1013 = vmatpush1.xpose.msra.mxu0 0.0
    %1014 = vmatprep.subr.mxu0 0.0
    %1015 = vmatpush1.xpose.msra.mxu0 0.0
    %1016 = vmatprep.subr.mxu0 0.0
    %1017 = vmatpush1.xpose.msra.mxu0 0.0
    %1018 = vmatprep.subr.mxu0 0.0
    %1019 = vmatpush1.xpose.msra.mxu0 0.0
    %1020 = vmatprep.subr.mxu0 0.0
    %1021 = vmatpush1.xpose.msra.mxu0 0.0
    %1022 = vmatprep.subr.mxu0 0.0
    %1023 = vmatpush1.xpose.msra.mxu0 0.0
    %1024 = vmatprep.subr.mxu0 0.0
    %1025 = vmatpush1.xpose.msra.mxu0 0.0
    %1026 = vmatprep.subr.mxu0 0.0
    %1027 = vmatpush1.xpose.msra.mxu0 0.0
    %1028 = vmatprep.subr.mxu0 0.0
    %1029 = vmatpush1.xpose.msra.mxu0 0.0
    %1030 = vmatprep.subr.mxu0 0.0
    %1031 = vmatpush1.xpose.msra.mxu0 0.0
    %1032 = vmatprep.subr.mxu0 0.0
    %1033 = vmatpush1.xpose.msra.mxu0 %v1001
    %1034 = vmatprep.subr.mxu0 0.0
    %1035 = vmatpush2.xpose.msra.mxu0 0.0
    %1036 = vmatprep.subr.mxu0 0.0
    %1037 = vmatpush2.xpose.msra.mxu0 0.0
    %1038 = vmatprep.subr.mxu0 0.0
    %1039 = vmatpush2.xpose.msra.mxu0 0.0
    %1040 = vmatprep.subr.mxu0 0.0
    %1041 = vmatpush2.xpose.msra.mxu0 0.0
    %1042 = vmatprep.subr.mxu0 0.0
    %1043 = vmatpush2.xpose.msra.mxu0 0.0
    %1044 = vmatprep.subr.mxu0 0.0
    %1045 = vmatpush2.xpose.msra.mxu0 0.0
    %1046 = vmatprep.subr.mxu0 0.0
    %1047 = vmatpush2.xpose.msra.mxu0 0.0
    %1048 = vmatprep.subr.mxu0 0.0
    %1049 = vmatpush2.xpose.msra.mxu0 0.0
    %1050 = vmatprep.subr.mxu0 0.0
    %1051 = vmatpush2.xpose.msra.mxu0 0.0
    %1052 = vmatprep.subr.mxu0 0.0
    %1053 = vmatpush2.xpose.msra.mxu0 0.0
    %1054 = vmatprep.subr.mxu0 0.0
    %1055 = vmatpush2.xpose.msra.mxu0 0.0
    %1056 = vmatprep.subr.mxu0 0.0
    %1057 = vmatpush2.xpose.msra.mxu0 0.0
    %1058 = vmatprep.subr.mxu0 0.0
    %1059 = vmatpush2.xpose.msra.mxu0 0.0
    %1060 = vmatprep.subr.mxu0 0.0
    %1061 = vmatpush2.xpose.msra.mxu0 0.0
    %1062 = vmatprep.subr.mxu0 0.0
    %1063 = vmatpush2.xpose.msra.mxu0 0.0
    %1064 = vmatprep.subr.mxu0 0.0
    %1065 = vmatpush2.xpose.msra.mxu0 0.0
    %1066 = vmatprep.mubr.f32.mxu0 0.0
    %1067 = vmatmul.mubr.f32.gmra.mxu0 %v923
    %v1068 = vpop.f32.mrf.mxu0
    %v1069 = vadd.f32 0.0, %v1068
    %v1070 = vpop.f32.mrf.mxu0
    %1071 = vdwg.mxu0
    %v1072 = vrcp.pop %v1069
    %v1073 = vmul.f32 %v994, %v1072
    %vm1074 = vcmask 13312
    %1075 = vst.msk [vmem:[#allocation2] sm:$0x3f] %vm1074, %v1073
    %v1076 = vld [vmem:[#allocation2] sm:$0x3]
    %v1077 = vld [vmem:[#allocation2 + $0x2] sm:$0x3]
    %v1078 = vadd.f32 %v1076, %v1077
    %v1079 = vld [vmem:[#allocation2 + $0x4] sm:$0x3]
    %v1080 = vadd.f32 %v1078, %v1079
    %v1081 = vmul.f32 %v1080, 0.33333334
    %vm1082 = vcmask 9216
    %1083 = vst.msk [vmem:[#allocation12] sm:$0x3] %vm1082, %v1081
    // Predicated region
    $region58: #{_pooling_forward_jit.1} parent=1 // pred_check
      _
    $region59: #{_pooling_forward_jit.1} parent=1 // pred_check_branch
      %1085 = sbr.rel (0) target = $region61
    $region60: #{_pooling_forward_jit.1} parent=1 // pred_region
      %s1087 = ssub.s32 32, 32
      %1088 = vsyncadd [#allocation5], %s1087
      %s1090 = sshll.u32 [#allocation12], 4
      %s1091 = int_to_ptr.vmem [resolvable:$true] %s1090
      %1093 = dma.vmem_to_hbm [thread:$0]  %s1091, 32, %s9, [#allocation5]
    $region61: #{_pooling_forward_jit.1} parent=1 // pred_fallthru
      _
    // Predicated region
    $region62: #{_pooling_forward_jit.1} parent=1 // pred_check
      _
    $region63: #{_pooling_forward_jit.1} parent=1 // pred_check_branch
      %1095 = sbr.rel (0) target = $region65
    $region64: #{_pooling_forward_jit.1} parent=1 // pred_region
      _
    $region65: #{_pooling_forward_jit.1} parent=1 // pred_fallthru
      _
    // Predicated region
    $region66: #{_pooling_forward_jit.1} parent=1 // pred_check
      _
    $region67: #{_pooling_forward_jit.1} parent=1 // pred_check_branch
      %1097 = sbr.rel (0) target = $region69
    $region68: #{_pooling_forward_jit.1} parent=1 // pred_region
      _
    $region69: #{_pooling_forward_jit.1} parent=1 // pred_fallthru
      _
    // Predicated region
    $region70: #{_pooling_forward_jit.1} parent=1 // pred_check
      _
    $region71: #{_pooling_forward_jit.1} parent=1 // pred_check_branch
      %1099 = sbr.rel (0) target = $region73
    $region72: #{_pooling_forward_jit.1} parent=1 // pred_region
      %1100 = dma.done [#allocation5], 32
    $region73: #{_pooling_forward_jit.1} parent=1 // pred_fallthru
      _
    // Predicated region
    $region74: #{_pooling_forward_jit.1} parent=1 // pred_check
      _
    $region75: #{_pooling_forward_jit.1} parent=1 // pred_check_branch
      %1102 = sbr.rel (0) target = $region77
    $region76: #{_pooling_forward_jit.1} parent=1 // pred_region
      _
    $region77: #{_pooling_forward_jit.1} parent=1 // pred_fallthru
      _
    // Predicated region
    $region78: #{_pooling_forward_jit.1} parent=1 // pred_check
      _
    $region79: #{_pooling_forward_jit.1} parent=1 // pred_check_branch
      %1104 = sbr.rel (0) target = $region81
    $region80: #{_pooling_forward_jit.1} parent=1 // pred_region
      _
    $region81: #{_pooling_forward_jit.1} parent=1 // pred_fallthru
      _
    %1105 = vsyncpa [#allocation4], 1
    %1106 = vsyncpa [#allocation7], 1
    %1107 = vsyncpa [#allocation10], 1
    %1108 = vsyncpa [#allocation5], 1

</llo_original>
